<compile_context>
chip_gen: v7x
topology: tpu7x:2x2x1
jax: 0.10.0
libtpu: 0.0.40
codegen_flags: <defaults>
</compile_context>

<pallas_src>
import math

import jax
import jax.numpy as jnp
from jax.experimental import pallas as pl
from jax.experimental.pallas import tpu as pltpu

_INV_SQRT2 = 1.0 / math.sqrt(2.0)


def unet_attention_block_kernel(
    gns_ref, gnh_ref,               # GroupNorm per-(batch,channel) scale/shift (1, C, 1) f32
    wci_ref, bci_ref,               # conv_input 1x1:  W (C, C) bf16, b (C, 1) f32
    ln1g_ref, ln1b_ref,
    ln2g_ref, ln2b_ref,
    ln3g_ref, ln3b_ref,             # LayerNorm affines (C, 1) f32
    wa_ref, ba_ref,                 # GEGLU value proj (4C, C) bf16, (4C, 1) f32
    wg_ref, bg_ref,                 # GEGLU gate  proj (4C, C) bf16, (4C, 1) f32
    w2_ref, b2_ref,                 # linear_gelu_2    (C, 4C) bf16, (C, 1) f32
    wco_ref, bco_ref,               # conv_output 1x1  (C, C)  bf16, (C, 1) f32
    x_ref,                          # (1, C, T) input tile (channel-major), f32
    o_ref,                          # (1, C, T) output tile
):
    f32 = jnp.float32
    bf16 = jnp.bfloat16

    # GroupNorm(32, C, eps=1e-6): stats precomputed in the wrapper -> per-channel FMA.
    xg = x_ref[0] * gns_ref[0] + gnh_ref[0]                              # (C, T) f32

    # conv_input 1x1 == channel matmul on the MXU (bf16 operands, f32 accumulation).
    t0 = jnp.dot(wci_ref[...], xg.astype(bf16),
                 preferred_element_type=f32) + bci_ref[...]

    def layernorm(v, g_ref, b_ref):
        # Channels live on the sublane axis (axis 0); reduce across it (XLU/VPU).
        m = jnp.mean(v, axis=0, keepdims=True)
        var = jnp.mean(jnp.square(v - m), axis=0, keepdims=True)
        return (v - m) * jax.lax.rsqrt(var + 1e-5) * g_ref[...] + b_ref[...]

    # attention_1 / attention_2 outputs are discarded in the reference forward
    # (dead code) -> only LayerNorm + residual remain.
    x1 = layernorm(t0, ln1g_ref, ln1b_ref) + t0
    x2 = layernorm(x1, ln2g_ref, ln2b_ref) + x1
    x3 = layernorm(x2, ln3g_ref, ln3b_ref)

    # GEGLU feed-forward; linear_gelu_1 split into value/gate matmuls (no 8C-wide
    # intermediate, no slices).
    x3b = x3.astype(bf16)
    a = jnp.dot(wa_ref[...], x3b, preferred_element_type=f32) + ba_ref[...]
    gate = jnp.dot(wg_ref[...], x3b, preferred_element_type=f32) + bg_ref[...]
    gelu = 0.5 * gate * (1.0 + jax.lax.erf(gate * _INV_SQRT2))           # exact GELU, f32
    ff = jnp.dot(w2_ref[...], (a * gelu).astype(bf16),
                 preferred_element_type=f32) + b2_ref[...]

    # Reference adds the *stale* residue_short (= x1) here -- reproduced literally.
    t5 = ff + x1

    # conv_output 1x1 + long residual (re-read the already-resident input tile).
    out = jnp.dot(wco_ref[...], t5.astype(bf16),
                  preferred_element_type=f32) + bco_ref[...] + x_ref[0]
    o_ref[0] = out.astype(o_ref.dtype)


def _pick_hw_tile(hw, c, weight_bytes, budget_bytes):
    """Largest lane-aligned HW tile that (a) divides HW and (b) fits in the VMEM
    budget next to the resident weights (double-buffered in/out f32 tiles plus a
    rough working set of ~10 (C,T)-sized f32 intermediates)."""
    for t in (1024, 512, 256, 128):
        if hw % t == 0:
            act_bytes = 4 * c * t * 4            # in/out tiles, double-buffered
            work_bytes = 10 * c * t * 4          # t0/x1/x2/x3 + a/gate (4C wide) etc.
            if weight_bytes + act_bytes + work_bytes <= budget_bytes:
                return t
    return hw  # full-extent block (valid even if not a multiple of 128)


def unet_attention_block(x, context, params, n_groups=32):
    """x: (N, C, H, W) float32 NCHW. `context` is unused (attention_2 result is
    discarded in the reference forward -> dead code)."""
    del context
    n, c, h, w = x.shape
    hw = h * w
    x3d = x.reshape(n, c, hw)                                   # channel-major tokens

    # --- GroupNorm statistics: tiny two-pass f32 reduction done in XLA so the kernel
    #     can tile HW freely; folded into per-(batch, channel) scale/shift. ---
    cpg = c // n_groups
    xr = x3d.reshape(n, n_groups, cpg * hw).astype(jnp.float32)
    mean = jnp.mean(xr, axis=-1)                                # (N, G)
    var = jnp.mean(jnp.square(xr - mean[..., None]), axis=-1)   # (N, G)
    inv = jax.lax.rsqrt(var + 1e-6)
    inv_c = jnp.repeat(inv, cpg, axis=1)                        # (N, C)
    mean_c = jnp.repeat(mean, cpg, axis=1)
    gamma = params["gn_gamma"][None, :]
    beta = params["gn_beta"][None, :]
    gn_scale = (gamma * inv_c)[..., None]                       # (N, C, 1)
    gn_shift = (beta - gamma * inv_c * mean_c)[..., None]       # (N, C, 1)

    # --- weights: bf16 MXU operands; biases / affines stay f32 as (D, 1) columns. ---
    bf = jnp.bfloat16
    col = lambda v: v.reshape(-1, 1).astype(jnp.float32)
    weight_args = [
        params["conv_in_w"].astype(bf), col(params["conv_in_b"]),
        col(params["ln1_gamma"]), col(params["ln1_beta"]),
        col(params["ln2_gamma"]), col(params["ln2_beta"]),
        col(params["ln3_gamma"]), col(params["ln3_beta"]),
        params["w1"][: 4 * c].astype(bf), col(params["b1"][: 4 * c]),   # GEGLU value
        params["w1"][4 * c:].astype(bf), col(params["b1"][4 * c:]),     # GEGLU gate
        params["w2"].astype(bf), col(params["b2"]),
        params["conv_out_w"].astype(bf), col(params["conv_out_b"]),
    ]
    weight_bytes = sum(int(a.size) * a.dtype.itemsize for a in weight_args)

    vmem_limit = 48 * 1024 * 1024                    # safe on v7x's 64 MiB physical
    tile = _pick_hw_tile(hw, c, weight_bytes, int(0.75 * vmem_limit))
    grid = (n, hw // tile)

    def _const_spec(a):
        nd = a.ndim
        return pl.BlockSpec(a.shape, lambda b, t: (0,) * nd)

    per_batch_spec = pl.BlockSpec((1, c, 1), lambda b, t: (b, 0, 0))
    in_specs = [per_batch_spec, per_batch_spec]
    in_specs += [_const_spec(a) for a in weight_args]
    in_specs.append(pl.BlockSpec((1, c, tile), lambda b, t: (b, 0, t)))

    cost = pl.CostEstimate(
        flops=int(28 * n * hw * c * c),                 # 5 matmuls: (2+8+8+8+2)*HW*C^2
        transcendentals=int(n * hw * (4 * c + 3)),      # erf on gate + 3 LN rsqrt
        bytes_accessed=int(2 * n * hw * c * 4 + weight_bytes + 2 * n * c * 4),
    )

    out_tok = pl.pallas_call(
        unet_attention_block_kernel,
        out_shape=jax.ShapeDtypeStruct((n, c, hw), x.dtype),
        grid=grid,
        in_specs=in_specs,
        out_specs=pl.BlockSpec((1, c, tile), lambda b, t: (b, 0, t)),
        compiler_params=pltpu.CompilerParams(
            dimension_semantics=("parallel", "parallel"),
            vmem_limit_bytes=vmem_limit,
        ),
        cost_estimate=cost,
    )(gn_scale, gn_shift, *weight_args, x3d)

    return out_tok.reshape(n, c, h, w)


def init_params(key, channels):
    c = channels
    ks = jax.random.split(key, 16)
    rnd = lambda k, shape, s=0.05: s * jax.random.normal(k, shape, dtype=jnp.float32)
    return dict(
        gn_gamma=1.0 + rnd(ks[0], (c,)),
        gn_beta=rnd(ks[1], (c,)),
        conv_in_w=rnd(ks[2], (c, c)),          # (C_out, C_in) 1x1 conv
        conv_in_b=rnd(ks[3], (c,)),
        ln1_gamma=1.0 + rnd(ks[4], (c,)),
        ln1_beta=rnd(ks[5], (c,)),
        ln2_gamma=1.0 + rnd(ks[6], (c,)),
        ln2_beta=rnd(ks[7], (c,)),
        ln3_gamma=1.0 + rnd(ks[8], (c,)),
        ln3_beta=rnd(ks[9], (c,)),
        w1=rnd(ks[10], (8 * c, c)),            # Linear(C, 8C) weight (out, in)
        b1=rnd(ks[11], (8 * c,)),
        w2=rnd(ks[12], (c, 4 * c)),            # Linear(4C, C) weight (out, in)
        b2=rnd(ks[13], (c,)),
        conv_out_w=rnd(ks[14], (c, c)),
        conv_out_b=rnd(ks[15], (c,)),
    )
    # TODO(synk): SelfAttention / CrossAttention weights are not created because their
    # forward results are discarded in the reference module's forward (dead code).


def _mm_bf16(a, w):
    """Emulate the kernel's MXU path: bf16 operands, f32 accumulation.  a:(N,S,K), w:(O,K)."""
    return jnp.einsum("nsk,ok->nso", a.astype(jnp.bfloat16), w.astype(jnp.bfloat16),
                      preferred_element_type=jnp.float32)


def reference_forward(x, params, n_groups=32):
    """Pure-JAX reference mirroring the (literal) PyTorch forward, with the same bf16
    matmul-operand quantization as the kernel, for validation."""
    n, c, h, w = x.shape
    hw = h * w
    cpg = c // n_groups
    # GroupNorm(32, C, eps=1e-6) — two-pass f32
    xr = x.reshape(n, n_groups, cpg * hw)
    mean = xr.mean(-1, keepdims=True)
    var = ((xr - mean) ** 2).mean(-1, keepdims=True)
    xn = ((xr - mean) / jnp.sqrt(var + 1e-6)).reshape(n, c, hw)
    xn = xn * params["gn_gamma"][None, :, None] + params["gn_beta"][None, :, None]
    tok = xn.transpose(0, 2, 1)                                  # (N, HW, C)
    t0 = _mm_bf16(tok, params["conv_in_w"]) + params["conv_in_b"]

    def ln(v, g, b):
        m = v.mean(-1, keepdims=True)
        va = ((v - m) ** 2).mean(-1, keepdims=True)
        return (v - m) / jnp.sqrt(va + 1e-5) * g + b

    x1 = ln(t0, params["ln1_gamma"], params["ln1_beta"]) + t0    # attention_1: dead code
    x2 = ln(x1, params["ln2_gamma"], params["ln2_beta"]) + x1    # attention_2: dead code
    x3 = ln(x2, params["ln3_gamma"], params["ln3_beta"])
    a = _mm_bf16(x3, params["w1"][: 4 * c]) + params["b1"][: 4 * c]
    gate = _mm_bf16(x3, params["w1"][4 * c:]) + params["b1"][4 * c:]
    gelu = 0.5 * gate * (1.0 + jax.lax.erf(gate * _INV_SQRT2))
    ff = _mm_bf16(a * gelu, params["w2"]) + params["b2"]
    t5 = ff + x1                                                 # literal: stale residue_short
    out_tok = _mm_bf16(t5, params["conv_out_w"]) + params["conv_out_b"]
    return out_tok.transpose(0, 2, 1).reshape(n, c, h, w) + x


if __name__ == "__main__":
    key = jax.random.PRNGKey(0)
    n_head, n_embd = 4, 8
    channels = n_head * n_embd          # 32 (GroupNorm(32, ...) needs a multiple of 32)
    N, H, W = 2, 16, 16
    seq, d_context = 8, 64              # context is dead code in the reference forward

    k_x, k_ctx, k_p = jax.random.split(key, 3)
    x = jax.random.normal(k_x, (N, channels, H, W), dtype=jnp.float32)       # NCHW
    context = jax.random.normal(k_ctx, (N, seq, d_context), dtype=jnp.float32)
    params = init_params(k_p, channels)

    fwd = jax.jit(unet_attention_block)
    out = jax.block_until_ready(fwd(x, context, params))
    assert out.shape == x.shape and out.dtype == x.dtype

    ref = jax.block_until_ready(reference_forward(x, params))
    assert bool(jnp.all(jnp.isfinite(out)))
    err = float(jnp.max(jnp.abs(out - ref)))
    assert bool(jnp.allclose(out, ref, atol=5e-3, rtol=5e-3)), err
    print("KERNEL_OK")
</pallas_src>

<mosaic_0001>
module attributes {stable_mosaic.version = 11 : i64} {
  func.func @unet_attention_block_kernel(%arg0: i32, %arg1: i32, %arg2: memref<1x32x1xf32, #tpu.memory_space<vmem>>, %arg3: memref<1x32x1xf32, #tpu.memory_space<vmem>>, %arg4: memref<32x32xbf16, #tpu.memory_space<vmem>>, %arg5: memref<32x1xf32, #tpu.memory_space<vmem>>, %arg6: memref<32x1xf32, #tpu.memory_space<vmem>>, %arg7: memref<32x1xf32, #tpu.memory_space<vmem>>, %arg8: memref<32x1xf32, #tpu.memory_space<vmem>>, %arg9: memref<32x1xf32, #tpu.memory_space<vmem>>, %arg10: memref<32x1xf32, #tpu.memory_space<vmem>>, %arg11: memref<32x1xf32, #tpu.memory_space<vmem>>, %arg12: memref<128x32xbf16, #tpu.memory_space<vmem>>, %arg13: memref<128x1xf32, #tpu.memory_space<vmem>>, %arg14: memref<128x32xbf16, #tpu.memory_space<vmem>>, %arg15: memref<128x1xf32, #tpu.memory_space<vmem>>, %arg16: memref<32x128xbf16, #tpu.memory_space<vmem>>, %arg17: memref<32x1xf32, #tpu.memory_space<vmem>>, %arg18: memref<32x32xbf16, #tpu.memory_space<vmem>>, %arg19: memref<32x1xf32, #tpu.memory_space<vmem>>, %arg20: memref<1x32x256xf32, #tpu.memory_space<vmem>>, %arg21: memref<1x32x256xf32, #tpu.memory_space<vmem>>) attributes {dimension_semantics = [#tpu.dimension_semantics<parallel>, #tpu.dimension_semantics<parallel>], iteration_bounds = array<i64: 2, 1>, scalar_prefetch = 0 : i64, scratch_operands = 0 : i64, tpu.core_type = #tpu.core_type<tc>, window_params = [{transform_indices = @transform_0, window_bounds = array<i64: 1, 32, 1>}, {transform_indices = @transform_1, window_bounds = array<i64: 1, 32, 1>}, {pipeline_mode = #tpu.pipeline_mode<synchronous>, transform_indices = @transform_2, window_bounds = array<i64: 32, 32>}, {pipeline_mode = #tpu.pipeline_mode<synchronous>, transform_indices = @transform_3, window_bounds = array<i64: 32, 1>}, {pipeline_mode = #tpu.pipeline_mode<synchronous>, transform_indices = @transform_4, window_bounds = array<i64: 32, 1>}, {pipeline_mode = #tpu.pipeline_mode<synchronous>, transform_indices = @transform_5, window_bounds = array<i64: 32, 1>}, {pipeline_mode = #tpu.pipeline_mode<synchronous>, transform_indices = @transform_6, window_bounds = array<i64: 32, 1>}, {pipeline_mode = #tpu.pipeline_mode<synchronous>, transform_indices = @transform_7, window_bounds = array<i64: 32, 1>}, {pipeline_mode = #tpu.pipeline_mode<synchronous>, transform_indices = @transform_8, window_bounds = array<i64: 32, 1>}, {pipeline_mode = #tpu.pipeline_mode<synchronous>, transform_indices = @transform_9, window_bounds = array<i64: 32, 1>}, {pipeline_mode = #tpu.pipeline_mode<synchronous>, transform_indices = @transform_10, window_bounds = array<i64: 128, 32>}, {pipeline_mode = #tpu.pipeline_mode<synchronous>, transform_indices = @transform_11, window_bounds = array<i64: 128, 1>}, {pipeline_mode = #tpu.pipeline_mode<synchronous>, transform_indices = @transform_12, window_bounds = array<i64: 128, 32>}, {pipeline_mode = #tpu.pipeline_mode<synchronous>, transform_indices = @transform_13, window_bounds = array<i64: 128, 1>}, {pipeline_mode = #tpu.pipeline_mode<synchronous>, transform_indices = @transform_14, window_bounds = array<i64: 32, 128>}, {pipeline_mode = #tpu.pipeline_mode<synchronous>, transform_indices = @transform_15, window_bounds = array<i64: 32, 1>}, {pipeline_mode = #tpu.pipeline_mode<synchronous>, transform_indices = @transform_16, window_bounds = array<i64: 32, 32>}, {pipeline_mode = #tpu.pipeline_mode<synchronous>, transform_indices = @transform_17, window_bounds = array<i64: 32, 1>}, {transform_indices = @transform_18, window_bounds = array<i64: 1, 32, 256>}, {transform_indices = @transform_19, window_bounds = array<i64: 1, 32, 256>}]} {
    %c0 = arith.constant 0 : index
    %c0_0 = arith.constant 0 : index
    %c0_1 = arith.constant 0 : index
    %0 = vector.load %arg20[%c0, %c0_0, %c0_1] : memref<1x32x256xf32, #tpu.memory_space<vmem>>, vector<1x32x256xf32>
    %1 = vector.shape_cast %0 : vector<1x32x256xf32> to vector<32x256xf32>
    %c0_2 = arith.constant 0 : index
    %c0_3 = arith.constant 0 : index
    %c0_4 = arith.constant 0 : index
    %2 = vector.load %arg2[%c0_2, %c0_3, %c0_4] : memref<1x32x1xf32, #tpu.memory_space<vmem>>, vector<1x32x1xf32>
    %3 = vector.shape_cast %2 : vector<1x32x1xf32> to vector<32x1xf32>
    %4 = vector.broadcast %3 : vector<32x1xf32> to vector<32x256xf32>
    %5 = arith.mulf %1, %4 : vector<32x256xf32>
    %c0_5 = arith.constant 0 : index
    %c0_6 = arith.constant 0 : index
    %c0_7 = arith.constant 0 : index
    %6 = vector.load %arg3[%c0_5, %c0_6, %c0_7] : memref<1x32x1xf32, #tpu.memory_space<vmem>>, vector<1x32x1xf32>
    %7 = vector.shape_cast %6 : vector<1x32x1xf32> to vector<32x1xf32>
    %8 = vector.broadcast %7 : vector<32x1xf32> to vector<32x256xf32>
    %9 = arith.addf %5, %8 : vector<32x256xf32>
    %c0_8 = arith.constant 0 : index
    %c0_9 = arith.constant 0 : index
    %10 = vector.load %arg4[%c0_8, %c0_9] : memref<32x32xbf16, #tpu.memory_space<vmem>>, vector<32x32xbf16>
    %11 = arith.truncf %9 : vector<32x256xf32> to vector<32x256xbf16>
    %cst = arith.constant dense<0.000000e+00> : vector<32x256xf32>
    %12 = tpu.matmul %10, %11, %cst {dimension_numbers = #tpu.dot_dimension_numbers<[1], [0], [0], [1], [0, 0, 1, 1], [], []>} : vector<32x32xbf16>, vector<32x256xbf16>, vector<32x256xf32> -> vector<32x256xf32>
    %c0_10 = arith.constant 0 : index
    %c0_11 = arith.constant 0 : index
    %13 = vector.load %arg5[%c0_10, %c0_11] : memref<32x1xf32, #tpu.memory_space<vmem>>, vector<32x1xf32>
    %14 = vector.broadcast %13 : vector<32x1xf32> to vector<32x256xf32>
    %15 = arith.addf %12, %14 : vector<32x256xf32>
    %cst_12 = arith.constant dense<0.000000e+00> : vector<256xf32>
    %16 = vector.multi_reduction <add>, %15, %cst_12 [0] : vector<32x256xf32> to vector<256xf32>
    %17 = vector.shape_cast %16 : vector<256xf32> to vector<1x256xf32>
    %cst_13 = arith.constant 3.200000e+01 : f32
    %18 = vector.broadcast %cst_13 : f32 to vector<1x256xf32>
    %19 = arith.divf %17, %18 : vector<1x256xf32>
    %20 = vector.broadcast %19 : vector<1x256xf32> to vector<32x256xf32>
    %21 = arith.subf %15, %20 : vector<32x256xf32>
    %22 = arith.mulf %21, %21 : vector<32x256xf32>
    %cst_14 = arith.constant dense<0.000000e+00> : vector<256xf32>
    %23 = vector.multi_reduction <add>, %22, %cst_14 [0] : vector<32x256xf32> to vector<256xf32>
    %24 = vector.shape_cast %23 : vector<256xf32> to vector<1x256xf32>
    %cst_15 = arith.constant 3.200000e+01 : f32
    %25 = vector.broadcast %cst_15 : f32 to vector<1x256xf32>
    %26 = arith.divf %24, %25 : vector<1x256xf32>
    %27 = vector.broadcast %19 : vector<1x256xf32> to vector<32x256xf32>
    %28 = arith.subf %15, %27 : vector<32x256xf32>
    %cst_16 = arith.constant 9.99999974E-6 : f32
    %29 = vector.broadcast %cst_16 : f32 to vector<1x256xf32>
    %30 = arith.addf %26, %29 : vector<1x256xf32>
    %31 = math.rsqrt %30 : vector<1x256xf32>
    %32 = vector.broadcast %31 : vector<1x256xf32> to vector<32x256xf32>
    %33 = arith.mulf %28, %32 : vector<32x256xf32>
    %c0_17 = arith.constant 0 : index
    %c0_18 = arith.constant 0 : index
    %34 = vector.load %arg6[%c0_17, %c0_18] : memref<32x1xf32, #tpu.memory_space<vmem>>, vector<32x1xf32>
    %35 = vector.broadcast %34 : vector<32x1xf32> to vector<32x256xf32>
    %36 = arith.mulf %33, %35 : vector<32x256xf32>
    %c0_19 = arith.constant 0 : index
    %c0_20 = arith.constant 0 : index
    %37 = vector.load %arg7[%c0_19, %c0_20] : memref<32x1xf32, #tpu.memory_space<vmem>>, vector<32x1xf32>
    %38 = vector.broadcast %37 : vector<32x1xf32> to vector<32x256xf32>
    %39 = arith.addf %36, %38 : vector<32x256xf32>
    %40 = arith.addf %39, %15 : vector<32x256xf32>
    %cst_21 = arith.constant dense<0.000000e+00> : vector<256xf32>
    %41 = vector.multi_reduction <add>, %40, %cst_21 [0] : vector<32x256xf32> to vector<256xf32>
    %42 = vector.shape_cast %41 : vector<256xf32> to vector<1x256xf32>
    %cst_22 = arith.constant 3.200000e+01 : f32
    %43 = vector.broadcast %cst_22 : f32 to vector<1x256xf32>
    %44 = arith.divf %42, %43 : vector<1x256xf32>
    %45 = vector.broadcast %44 : vector<1x256xf32> to vector<32x256xf32>
    %46 = arith.subf %40, %45 : vector<32x256xf32>
    %47 = arith.mulf %46, %46 : vector<32x256xf32>
    %cst_23 = arith.constant dense<0.000000e+00> : vector<256xf32>
    %48 = vector.multi_reduction <add>, %47, %cst_23 [0] : vector<32x256xf32> to vector<256xf32>
    %49 = vector.shape_cast %48 : vector<256xf32> to vector<1x256xf32>
    %cst_24 = arith.constant 3.200000e+01 : f32
    %50 = vector.broadcast %cst_24 : f32 to vector<1x256xf32>
    %51 = arith.divf %49, %50 : vector<1x256xf32>
    %52 = vector.broadcast %44 : vector<1x256xf32> to vector<32x256xf32>
    %53 = arith.subf %40, %52 : vector<32x256xf32>
    %cst_25 = arith.constant 9.99999974E-6 : f32
    %54 = vector.broadcast %cst_25 : f32 to vector<1x256xf32>
    %55 = arith.addf %51, %54 : vector<1x256xf32>
    %56 = math.rsqrt %55 : vector<1x256xf32>
    %57 = vector.broadcast %56 : vector<1x256xf32> to vector<32x256xf32>
    %58 = arith.mulf %53, %57 : vector<32x256xf32>
    %c0_26 = arith.constant 0 : index
    %c0_27 = arith.constant 0 : index
    %59 = vector.load %arg8[%c0_26, %c0_27] : memref<32x1xf32, #tpu.memory_space<vmem>>, vector<32x1xf32>
    %60 = vector.broadcast %59 : vector<32x1xf32> to vector<32x256xf32>
    %61 = arith.mulf %58, %60 : vector<32x256xf32>
    %c0_28 = arith.constant 0 : index
    %c0_29 = arith.constant 0 : index
    %62 = vector.load %arg9[%c0_28, %c0_29] : memref<32x1xf32, #tpu.memory_space<vmem>>, vector<32x1xf32>
    %63 = vector.broadcast %62 : vector<32x1xf32> to vector<32x256xf32>
    %64 = arith.addf %61, %63 : vector<32x256xf32>
    %65 = arith.addf %64, %40 : vector<32x256xf32>
    %cst_30 = arith.constant dense<0.000000e+00> : vector<256xf32>
    %66 = vector.multi_reduction <add>, %65, %cst_30 [0] : vector<32x256xf32> to vector<256xf32>
    %67 = vector.shape_cast %66 : vector<256xf32> to vector<1x256xf32>
    %cst_31 = arith.constant 3.200000e+01 : f32
    %68 = vector.broadcast %cst_31 : f32 to vector<1x256xf32>
    %69 = arith.divf %67, %68 : vector<1x256xf32>
    %70 = vector.broadcast %69 : vector<1x256xf32> to vector<32x256xf32>
    %71 = arith.subf %65, %70 : vector<32x256xf32>
    %72 = arith.mulf %71, %71 : vector<32x256xf32>
    %cst_32 = arith.constant dense<0.000000e+00> : vector<256xf32>
    %73 = vector.multi_reduction <add>, %72, %cst_32 [0] : vector<32x256xf32> to vector<256xf32>
    %74 = vector.shape_cast %73 : vector<256xf32> to vector<1x256xf32>
    %cst_33 = arith.constant 3.200000e+01 : f32
    %75 = vector.broadcast %cst_33 : f32 to vector<1x256xf32>
    %76 = arith.divf %74, %75 : vector<1x256xf32>
    %77 = vector.broadcast %69 : vector<1x256xf32> to vector<32x256xf32>
    %78 = arith.subf %65, %77 : vector<32x256xf32>
    %cst_34 = arith.constant 9.99999974E-6 : f32
    %79 = vector.broadcast %cst_34 : f32 to vector<1x256xf32>
    %80 = arith.addf %76, %79 : vector<1x256xf32>
    %81 = math.rsqrt %80 : vector<1x256xf32>
    %82 = vector.broadcast %81 : vector<1x256xf32> to vector<32x256xf32>
    %83 = arith.mulf %78, %82 : vector<32x256xf32>
    %c0_35 = arith.constant 0 : index
    %c0_36 = arith.constant 0 : index
    %84 = vector.load %arg10[%c0_35, %c0_36] : memref<32x1xf32, #tpu.memory_space<vmem>>, vector<32x1xf32>
    %85 = vector.broadcast %84 : vector<32x1xf32> to vector<32x256xf32>
    %86 = arith.mulf %83, %85 : vector<32x256xf32>
    %c0_37 = arith.constant 0 : index
    %c0_38 = arith.constant 0 : index
    %87 = vector.load %arg11[%c0_37, %c0_38] : memref<32x1xf32, #tpu.memory_space<vmem>>, vector<32x1xf32>
    %88 = vector.broadcast %87 : vector<32x1xf32> to vector<32x256xf32>
    %89 = arith.addf %86, %88 : vector<32x256xf32>
    %90 = arith.truncf %89 : vector<32x256xf32> to vector<32x256xbf16>
    %c0_39 = arith.constant 0 : index
    %c0_40 = arith.constant 0 : index
    %91 = vector.load %arg12[%c0_39, %c0_40] : memref<128x32xbf16, #tpu.memory_space<vmem>>, vector<128x32xbf16>
    %cst_41 = arith.constant dense<0.000000e+00> : vector<128x256xf32>
    %92 = tpu.matmul %91, %90, %cst_41 {dimension_numbers = #tpu.dot_dimension_numbers<[1], [0], [0], [1], [0, 0, 1, 1], [], []>} : vector<128x32xbf16>, vector<32x256xbf16>, vector<128x256xf32> -> vector<128x256xf32>
    %c0_42 = arith.constant 0 : index
    %c0_43 = arith.constant 0 : index
    %93 = vector.load %arg13[%c0_42, %c0_43] : memref<128x1xf32, #tpu.memory_space<vmem>>, vector<128x1xf32>
    %94 = vector.broadcast %93 : vector<128x1xf32> to vector<128x256xf32>
    %95 = arith.addf %92, %94 : vector<128x256xf32>
    %c0_44 = arith.constant 0 : index
    %c0_45 = arith.constant 0 : index
    %96 = vector.load %arg14[%c0_44, %c0_45] : memref<128x32xbf16, #tpu.memory_space<vmem>>, vector<128x32xbf16>
    %cst_46 = arith.constant dense<0.000000e+00> : vector<128x256xf32>
    %97 = tpu.matmul %96, %90, %cst_46 {dimension_numbers = #tpu.dot_dimension_numbers<[1], [0], [0], [1], [0, 0, 1, 1], [], []>} : vector<128x32xbf16>, vector<32x256xbf16>, vector<128x256xf32> -> vector<128x256xf32>
    %c0_47 = arith.constant 0 : index
    %c0_48 = arith.constant 0 : index
    %98 = vector.load %arg15[%c0_47, %c0_48] : memref<128x1xf32, #tpu.memory_space<vmem>>, vector<128x1xf32>
    %99 = vector.broadcast %98 : vector<128x1xf32> to vector<128x256xf32>
    %100 = arith.addf %97, %99 : vector<128x256xf32>
    %cst_49 = arith.constant 5.000000e-01 : f32
    %101 = vector.broadcast %cst_49 : f32 to vector<128x256xf32>
    %102 = arith.mulf %101, %100 : vector<128x256xf32>
    %cst_50 = arith.constant 0.707106769 : f32
    %103 = vector.broadcast %cst_50 : f32 to vector<128x256xf32>
    %104 = arith.mulf %100, %103 : vector<128x256xf32>
    %105 = math.erf %104 : vector<128x256xf32>
    %cst_51 = arith.constant 1.000000e+00 : f32
    %106 = vector.broadcast %cst_51 : f32 to vector<128x256xf32>
    %107 = arith.addf %106, %105 : vector<128x256xf32>
    %108 = arith.mulf %102, %107 : vector<128x256xf32>
    %c0_52 = arith.constant 0 : index
    %c0_53 = arith.constant 0 : index
    %109 = vector.load %arg16[%c0_52, %c0_53] : memref<32x128xbf16, #tpu.memory_space<vmem>>, vector<32x128xbf16>
    %110 = arith.mulf %95, %108 : vector<128x256xf32>
    %111 = arith.truncf %110 : vector<128x256xf32> to vector<128x256xbf16>
    %cst_54 = arith.constant dense<0.000000e+00> : vector<32x256xf32>
    %112 = tpu.matmul %109, %111, %cst_54 {dimension_numbers = #tpu.dot_dimension_numbers<[1], [0], [0], [1], [0, 0, 1, 1], [], []>} : vector<32x128xbf16>, vector<128x256xbf16>, vector<32x256xf32> -> vector<32x256xf32>
    %c0_55 = arith.constant 0 : index
    %c0_56 = arith.constant 0 : index
    %113 = vector.load %arg17[%c0_55, %c0_56] : memref<32x1xf32, #tpu.memory_space<vmem>>, vector<32x1xf32>
    %114 = vector.broadcast %113 : vector<32x1xf32> to vector<32x256xf32>
    %115 = arith.addf %112, %114 : vector<32x256xf32>
    %116 = arith.addf %115, %40 : vector<32x256xf32>
    %c0_57 = arith.constant 0 : index
    %c0_58 = arith.constant 0 : index
    %117 = vector.load %arg18[%c0_57, %c0_58] : memref<32x32xbf16, #tpu.memory_space<vmem>>, vector<32x32xbf16>
    %118 = arith.truncf %116 : vector<32x256xf32> to vector<32x256xbf16>
    %cst_59 = arith.constant dense<0.000000e+00> : vector<32x256xf32>
    %119 = tpu.matmul %117, %118, %cst_59 {dimension_numbers = #tpu.dot_dimension_numbers<[1], [0], [0], [1], [0, 0, 1, 1], [], []>} : vector<32x32xbf16>, vector<32x256xbf16>, vector<32x256xf32> -> vector<32x256xf32>
    %c0_60 = arith.constant 0 : index
    %c0_61 = arith.constant 0 : index
    %120 = vector.load %arg19[%c0_60, %c0_61] : memref<32x1xf32, #tpu.memory_space<vmem>>, vector<32x1xf32>
    %121 = vector.broadcast %120 : vector<32x1xf32> to vector<32x256xf32>
    %122 = arith.addf %119, %121 : vector<32x256xf32>
    %c0_62 = arith.constant 0 : index
    %c0_63 = arith.constant 0 : index
    %c0_64 = arith.constant 0 : index
    %123 = vector.load %arg20[%c0_62, %c0_63, %c0_64] : memref<1x32x256xf32, #tpu.memory_space<vmem>>, vector<1x32x256xf32>
    %124 = vector.shape_cast %123 : vector<1x32x256xf32> to vector<32x256xf32>
    %125 = arith.addf %122, %124 : vector<32x256xf32>
    %c0_65 = arith.constant 0 : index
    %c0_66 = arith.constant 0 : index
    %c0_67 = arith.constant 0 : index
    %126 = vector.load %arg21[%c0_65, %c0_66, %c0_67] : memref<1x32x256xf32, #tpu.memory_space<vmem>>, vector<1x32x256xf32>
    %127 = vector.shape_cast %126 : vector<1x32x256xf32> to vector<32x256xf32>
    %128 = vector.shape_cast %125 : vector<32x256xf32> to vector<1x32x256xf32>
    tpu.vector_store %arg21[%c0_65, %c0_66, %c0_67], %128 {strides = array<i32>} : memref<1x32x256xf32, #tpu.memory_space<vmem>>, vector<1x32x256xf32>,
    return
  }
  func.func @transform_0(%arg0: i32, %arg1: i32) -> (i32, i32, i32) {
    %c0_i32 = arith.constant 0 : i32
    %c0_i32_0 = arith.constant 0 : i32
    %c0_i32_1 = arith.constant 0 : i32
    return %arg0, %c0_i32, %c0_i32_0 : i32, i32, i32
  }
  func.func @transform_1(%arg0: i32, %arg1: i32) -> (i32, i32, i32) {
    %c0_i32 = arith.constant 0 : i32
    %c0_i32_0 = arith.constant 0 : i32
    %c0_i32_1 = arith.constant 0 : i32
    return %arg0, %c0_i32, %c0_i32_0 : i32, i32, i32
  }
  func.func @transform_2(%arg0: i32, %arg1: i32) -> (i32, i32) {
    %c0_i32 = arith.constant 0 : i32
    %c0_i32_0 = arith.constant 0 : i32
    %c0_i32_1 = arith.constant 0 : i32
    return %c0_i32, %c0_i32_0 : i32, i32
  }
  func.func @transform_3(%arg0: i32, %arg1: i32) -> (i32, i32) {
    %c0_i32 = arith.constant 0 : i32
    %c0_i32_0 = arith.constant 0 : i32
    %c0_i32_1 = arith.constant 0 : i32
    return %c0_i32, %c0_i32_0 : i32, i32
  }
  func.func @transform_4(%arg0: i32, %arg1: i32) -> (i32, i32) {
    %c0_i32 = arith.constant 0 : i32
    %c0_i32_0 = arith.constant 0 : i32
    %c0_i32_1 = arith.constant 0 : i32
    return %c0_i32, %c0_i32_0 : i32, i32
  }
  func.func @transform_5(%arg0: i32, %arg1: i32) -> (i32, i32) {
    %c0_i32 = arith.constant 0 : i32
    %c0_i32_0 = arith.constant 0 : i32
    %c0_i32_1 = arith.constant 0 : i32
    return %c0_i32, %c0_i32_0 : i32, i32
  }
  func.func @transform_6(%arg0: i32, %arg1: i32) -> (i32, i32) {
    %c0_i32 = arith.constant 0 : i32
    %c0_i32_0 = arith.constant 0 : i32
    %c0_i32_1 = arith.constant 0 : i32
    return %c0_i32, %c0_i32_0 : i32, i32
  }
  func.func @transform_7(%arg0: i32, %arg1: i32) -> (i32, i32) {
    %c0_i32 = arith.constant 0 : i32
    %c0_i32_0 = arith.constant 0 : i32
    %c0_i32_1 = arith.constant 0 : i32
    return %c0_i32, %c0_i32_0 : i32, i32
  }
  func.func @transform_8(%arg0: i32, %arg1: i32) -> (i32, i32) {
    %c0_i32 = arith.constant 0 : i32
    %c0_i32_0 = arith.constant 0 : i32
    %c0_i32_1 = arith.constant 0 : i32
    return %c0_i32, %c0_i32_0 : i32, i32
  }
  func.func @transform_9(%arg0: i32, %arg1: i32) -> (i32, i32) {
    %c0_i32 = arith.constant 0 : i32
    %c0_i32_0 = arith.constant 0 : i32
    %c0_i32_1 = arith.constant 0 : i32
    return %c0_i32, %c0_i32_0 : i32, i32
  }
  func.func @transform_10(%arg0: i32, %arg1: i32) -> (i32, i32) {
    %c0_i32 = arith.constant 0 : i32
    %c0_i32_0 = arith.constant 0 : i32
    %c0_i32_1 = arith.constant 0 : i32
    return %c0_i32, %c0_i32_0 : i32, i32
  }
  func.func @transform_11(%arg0: i32, %arg1: i32) -> (i32, i32) {
    %c0_i32 = arith.constant 0 : i32
    %c0_i32_0 = arith.constant 0 : i32
    %c0_i32_1 = arith.constant 0 : i32
    return %c0_i32, %c0_i32_0 : i32, i32
  }
  func.func @transform_12(%arg0: i32, %arg1: i32) -> (i32, i32) {
    %c0_i32 = arith.constant 0 : i32
    %c0_i32_0 = arith.constant 0 : i32
    %c0_i32_1 = arith.constant 0 : i32
    return %c0_i32, %c0_i32_0 : i32, i32
  }
  func.func @transform_13(%arg0: i32, %arg1: i32) -> (i32, i32) {
    %c0_i32 = arith.constant 0 : i32
    %c0_i32_0 = arith.constant 0 : i32
    %c0_i32_1 = arith.constant 0 : i32
    return %c0_i32, %c0_i32_0 : i32, i32
  }
  func.func @transform_14(%arg0: i32, %arg1: i32) -> (i32, i32) {
    %c0_i32 = arith.constant 0 : i32
    %c0_i32_0 = arith.constant 0 : i32
    %c0_i32_1 = arith.constant 0 : i32
    return %c0_i32, %c0_i32_0 : i32, i32
  }
  func.func @transform_15(%arg0: i32, %arg1: i32) -> (i32, i32) {
    %c0_i32 = arith.constant 0 : i32
    %c0_i32_0 = arith.constant 0 : i32
    %c0_i32_1 = arith.constant 0 : i32
    return %c0_i32, %c0_i32_0 : i32, i32
  }
  func.func @transform_16(%arg0: i32, %arg1: i32) -> (i32, i32) {
    %c0_i32 = arith.constant 0 : i32
    %c0_i32_0 = arith.constant 0 : i32
    %c0_i32_1 = arith.constant 0 : i32
    return %c0_i32, %c0_i32_0 : i32, i32
  }
  func.func @transform_17(%arg0: i32, %arg1: i32) -> (i32, i32) {
    %c0_i32 = arith.constant 0 : i32
    %c0_i32_0 = arith.constant 0 : i32
    %c0_i32_1 = arith.constant 0 : i32
    return %c0_i32, %c0_i32_0 : i32, i32
  }
  func.func @transform_18(%arg0: i32, %arg1: i32) -> (i32, i32, i32) {
    %c0_i32 = arith.constant 0 : i32
    %c0_i32_0 = arith.constant 0 : i32
    return %arg0, %c0_i32, %arg1 : i32, i32, i32
  }
  func.func @transform_19(%arg0: i32, %arg1: i32) -> (i32, i32, i32) {
    %c0_i32 = arith.constant 0 : i32
    %c0_i32_0 = arith.constant 0 : i32
    return %arg0, %c0_i32, %arg1 : i32, i32, i32
  }
}

</mosaic_0001>

<llo_original>
// kernel: unet_attention_block.1
$region0: #{unet_attention_block.1}
  #allocation0 [shape = 'u32[]', space=smem, size = 0x4, offset = 0x4, fixed_abs, tag = 'smem constant byte address 0x4 - core index']
  #allocation1 [shape = 'u32[144,128]{1,0:T(1,128)}', space=vmem, size = 0x12000, scoped, tag = 'internal scratch']
  %s0 = inlined_call_operand.vmem [shape: f32[2,32,1], index: 0, kind: input, shape index: {}]
  %s1 = inlined_call_operand.vmem [shape: f32[2,32,1], index: 1, kind: input, shape index: {}]
  %s2 = inlined_call_operand.vmem [shape: bf16[32,32], index: 2, kind: input, shape index: {}]
  %s3 = inlined_call_operand.vmem [shape: f32[32,1], index: 3, kind: input, shape index: {}]
  %s4 = inlined_call_operand.vmem [shape: f32[32,1], index: 4, kind: input, shape index: {}]
  %s5 = inlined_call_operand.vmem [shape: f32[32,1], index: 5, kind: input, shape index: {}]
  %s6 = inlined_call_operand.vmem [shape: f32[32,1], index: 6, kind: input, shape index: {}]
  %s7 = inlined_call_operand.vmem [shape: f32[32,1], index: 7, kind: input, shape index: {}]
  %s8 = inlined_call_operand.vmem [shape: f32[32,1], index: 8, kind: input, shape index: {}]
  %s9 = inlined_call_operand.vmem [shape: f32[32,1], index: 9, kind: input, shape index: {}]
  %s10 = inlined_call_operand.vmem [shape: bf16[128,32], index: 10, kind: input, shape index: {}]
  %s11 = inlined_call_operand.vmem [shape: f32[128,1], index: 11, kind: input, shape index: {}]
  %s12 = inlined_call_operand.vmem [shape: bf16[128,32], index: 12, kind: input, shape index: {}]
  %s13 = inlined_call_operand.vmem [shape: f32[128,1], index: 13, kind: input, shape index: {}]
  %s14 = inlined_call_operand.vmem [shape: bf16[32,128], index: 14, kind: input, shape index: {}]
  %s15 = inlined_call_operand.vmem [shape: f32[32,1], index: 15, kind: input, shape index: {}]
  %s16 = inlined_call_operand.vmem [shape: bf16[32,32], index: 16, kind: input, shape index: {}]
  %s17 = inlined_call_operand.vmem [shape: f32[32,1], index: 17, kind: input, shape index: {}]
  %s18 = inlined_call_operand.vmem [shape: f32[2,32,256], index: 18, kind: input, shape index: {}]
  %s19 = inlined_call_operand.vmem [shape: f32[2,32,256], index: 19, kind: output, shape index: {}]
  %s20 = sld [smem:[#allocation0]]
  $region109: #{unet_attention_block.1} parent=0
    _
  %s22 = ssub.s32 1, %s20
  %s23 = scalar_select 0, %s22, %s20
  loop: start=0, step=1, limit=4
  $region2: #{unet_attention_block.1} parent=0 // loop_pre_header
    _
  $region3: #{unet_attention_block.1} parent=0 // loop_header
    %s25 = sphi 0, %s29
    %p26 = scmp.ge.s32.totalorder %s25, 4
    %s32 = sphi 0, %s44
    %s33 = sphi 0, %s40
    %s34 = sphi 0, %s32
    %s35 = sphi 0, %s33
    %s36 = sphi 0, %s34
    %s37 = sphi 0, %s35
    %s47 = sphi 0, %s49
    %s50 = sphi 0, %s47
    %s51 = sphi 0, %s50
    %s67 = sphi 0, %s51
    %s73 = sphi 0, %s75
    %s76 = sphi 0, %s73
    %s77 = sphi 0, %s76
    %s93 = sphi 0, %s77
    %s97 = sphi 0, %s97
    %s99 = sphi 0, %s97
    %s100 = sphi 0, %s99
    %s114 = sphi 0, %s100
    %s118 = sphi 0, %s118
    %s120 = sphi 0, %s118
    %s121 = sphi 0, %s120
    %s135 = sphi 0, %s121
    %s139 = sphi 0, %s139
    %s141 = sphi 0, %s139
    %s142 = sphi 0, %s141
    %s156 = sphi 0, %s142
    %s160 = sphi 0, %s160
    %s162 = sphi 0, %s160
    %s163 = sphi 0, %s162
    %s177 = sphi 0, %s163
    %s181 = sphi 0, %s181
    %s183 = sphi 0, %s181
    %s184 = sphi 0, %s183
    %s198 = sphi 0, %s184
    %s202 = sphi 0, %s202
    %s204 = sphi 0, %s202
    %s205 = sphi 0, %s204
    %s219 = sphi 0, %s205
    %s223 = sphi 0, %s223
    %s225 = sphi 0, %s223
    %s226 = sphi 0, %s225
    %s240 = sphi 0, %s226
    %s244 = sphi 0, %s244
    %s246 = sphi 0, %s244
    %s247 = sphi 0, %s246
    %s261 = sphi 0, %s247
    %s265 = sphi 0, %s265
    %s267 = sphi 0, %s265
    %s268 = sphi 0, %s267
    %s282 = sphi 0, %s268
    %s286 = sphi 0, %s286
    %s288 = sphi 0, %s286
    %s289 = sphi 0, %s288
    %s303 = sphi 0, %s289
    %s307 = sphi 0, %s307
    %s309 = sphi 0, %s307
    %s310 = sphi 0, %s309
    %s324 = sphi 0, %s310
    %s328 = sphi 0, %s328
    %s330 = sphi 0, %s328
    %s331 = sphi 0, %s330
    %s345 = sphi 0, %s331
    %s349 = sphi 0, %s349
    %s351 = sphi 0, %s349
    %s352 = sphi 0, %s351
    %s366 = sphi 0, %s352
    %s370 = sphi 0, %s370
    %s372 = sphi 0, %s370
    %s373 = sphi 0, %s372
    %s387 = sphi 0, %s373
    %s391 = sphi 0, %s391
    %s393 = sphi 0, %s391
    %s394 = sphi 0, %s393
    %s408 = sphi 0, %s394
    %s412 = sphi 0, %s412
    %s414 = sphi 0, %s412
    %s415 = sphi 0, %s414
    %s429 = sphi 0, %s415
    %s437 = sphi 0, %s439
    %s440 = sphi 0, %s437
    %s441 = sphi 0, %s440
    %s457 = sphi 0, %s441
    %s465 = sphi 0, %s467
    %s468 = sphi 0, %s465
    %s469 = sphi 0, %s468
    %s485 = sphi 0, %s469
  $region4: #{unet_attention_block.1} parent=0 // loop_header_branch
    %28 = sbr.rel (%p26) target = $region8
  $region5: #{unet_attention_block.1} parent=0 // loop_body
    %s30 = ssub.s32 %s25, 1
    %s31 = ssub.s32 %s25, 2
    %s38 = sadd.s32 1, %s33
    %p39 = scmp.ge.s32.totalorder %s38, 1
    %s40 = scalar_select %p39, 0, %s38
    %s41 = sadd.s32 1, %s32
    %s42 = scalar_select %p39, %s41, %s32
    %p43 = scmp.ge.s32.totalorder %s42, 2
    %s44 = scalar_select %p43, 0, %s42
    %s45 = ssub.s32 %s32, %s44
    %p46 = scmp.eq.s32.totalorder %s45, 0
    %s48 = sadd.s32 %s47, 1
    %s49 = scalar_select %p46, %s47, %s48
    %p52 = pneg %p46
    %p53 = scmp.eq.s32.totalorder %s25, 1
    %p54 = por %p52, %p53
    %p55 = scmp.ne.s32.totalorder %s47, %s50
    %p56 = scmp.eq.s32.totalorder %s25, 0
    %p57 = por %p55, %p56
    %p58 = scmp.ne.s32.totalorder %s47, %s50
    %p59 = scmp.eq.s32.totalorder %s30, 1
    %p60 = por %p58, %p59
    %p61 = scmp.ne.s32.totalorder %s50, %s51
    %p62 = scmp.eq.s32.totalorder %s30, 0
    %p63 = por %p61, %p62
    %p64 = scmp.ne.s32.totalorder %s50, %s51
    %p65 = scmp.eq.s32.totalorder %s31, 1
    %p66 = por %p64, %p65
    %p68 = scmp.ne.s32.totalorder %s51, %s67
    %p69 = scmp.eq.s32.totalorder %s31, 0
    %p70 = por %p68, %p69
    %s71 = ssub.s32 %s32, %s44
    %p72 = scmp.eq.s32.totalorder %s71, 0
    %s74 = sadd.s32 %s73, 1
    %s75 = scalar_select %p72, %s73, %s74
    %p78 = pneg %p72
    %p79 = scmp.eq.s32.totalorder %s25, 1
    %p80 = por %p78, %p79
    %p81 = scmp.ne.s32.totalorder %s73, %s76
    %p82 = scmp.eq.s32.totalorder %s25, 0
    %p83 = por %p81, %p82
    %p84 = scmp.ne.s32.totalorder %s73, %s76
    %p85 = scmp.eq.s32.totalorder %s30, 1
    %p86 = por %p84, %p85
    %p87 = scmp.ne.s32.totalorder %s76, %s77
    %p88 = scmp.eq.s32.totalorder %s30, 0
    %p89 = por %p87, %p88
    %p90 = scmp.ne.s32.totalorder %s76, %s77
    %p91 = scmp.eq.s32.totalorder %s31, 1
    %p92 = por %p90, %p91
    %p94 = scmp.ne.s32.totalorder %s77, %s93
    %p95 = scmp.eq.s32.totalorder %s31, 0
    %p96 = por %p94, %p95
    %s98 = sadd.s32 %s97, 1
    %p101 = scmp.eq.s32.totalorder %s25, 1
    %p102 = scmp.ne.s32.totalorder %s97, %s99
    %p103 = scmp.eq.s32.totalorder %s25, 0
    %p104 = por %p102, %p103
    %p105 = scmp.ne.s32.totalorder %s97, %s99
    %p106 = scmp.eq.s32.totalorder %s30, 1
    %p107 = por %p105, %p106
    %p108 = scmp.ne.s32.totalorder %s99, %s100
    %p109 = scmp.eq.s32.totalorder %s30, 0
    %p110 = por %p108, %p109
    %p111 = scmp.ne.s32.totalorder %s99, %s100
    %p112 = scmp.eq.s32.totalorder %s31, 1
    %p113 = por %p111, %p112
    %p115 = scmp.ne.s32.totalorder %s100, %s114
    %p116 = scmp.eq.s32.totalorder %s31, 0
    %p117 = por %p115, %p116
    %s119 = sadd.s32 %s118, 1
    %p122 = scmp.eq.s32.totalorder %s25, 1
    %p123 = scmp.ne.s32.totalorder %s118, %s120
    %p124 = scmp.eq.s32.totalorder %s25, 0
    %p125 = por %p123, %p124
    %p126 = scmp.ne.s32.totalorder %s118, %s120
    %p127 = scmp.eq.s32.totalorder %s30, 1
    %p128 = por %p126, %p127
    %p129 = scmp.ne.s32.totalorder %s120, %s121
    %p130 = scmp.eq.s32.totalorder %s30, 0
    %p131 = por %p129, %p130
    %p132 = scmp.ne.s32.totalorder %s120, %s121
    %p133 = scmp.eq.s32.totalorder %s31, 1
    %p134 = por %p132, %p133
    %p136 = scmp.ne.s32.totalorder %s121, %s135
    %p137 = scmp.eq.s32.totalorder %s31, 0
    %p138 = por %p136, %p137
    %s140 = sadd.s32 %s139, 1
    %p143 = scmp.eq.s32.totalorder %s25, 1
    %p144 = scmp.ne.s32.totalorder %s139, %s141
    %p145 = scmp.eq.s32.totalorder %s25, 0
    %p146 = por %p144, %p145
    %p147 = scmp.ne.s32.totalorder %s139, %s141
    %p148 = scmp.eq.s32.totalorder %s30, 1
    %p149 = por %p147, %p148
    %p150 = scmp.ne.s32.totalorder %s141, %s142
    %p151 = scmp.eq.s32.totalorder %s30, 0
    %p152 = por %p150, %p151
    %p153 = scmp.ne.s32.totalorder %s141, %s142
    %p154 = scmp.eq.s32.totalorder %s31, 1
    %p155 = por %p153, %p154
    %p157 = scmp.ne.s32.totalorder %s142, %s156
    %p158 = scmp.eq.s32.totalorder %s31, 0
    %p159 = por %p157, %p158
    %s161 = sadd.s32 %s160, 1
    %p164 = scmp.eq.s32.totalorder %s25, 1
    %p165 = scmp.ne.s32.totalorder %s160, %s162
    %p166 = scmp.eq.s32.totalorder %s25, 0
    %p167 = por %p165, %p166
    %p168 = scmp.ne.s32.totalorder %s160, %s162
    %p169 = scmp.eq.s32.totalorder %s30, 1
    %p170 = por %p168, %p169
    %p171 = scmp.ne.s32.totalorder %s162, %s163
    %p172 = scmp.eq.s32.totalorder %s30, 0
    %p173 = por %p171, %p172
    %p174 = scmp.ne.s32.totalorder %s162, %s163
    %p175 = scmp.eq.s32.totalorder %s31, 1
    %p176 = por %p174, %p175
    %p178 = scmp.ne.s32.totalorder %s163, %s177
    %p179 = scmp.eq.s32.totalorder %s31, 0
    %p180 = por %p178, %p179
    %s182 = sadd.s32 %s181, 1
    %p185 = scmp.eq.s32.totalorder %s25, 1
    %p186 = scmp.ne.s32.totalorder %s181, %s183
    %p187 = scmp.eq.s32.totalorder %s25, 0
    %p188 = por %p186, %p187
    %p189 = scmp.ne.s32.totalorder %s181, %s183
    %p190 = scmp.eq.s32.totalorder %s30, 1
    %p191 = por %p189, %p190
    %p192 = scmp.ne.s32.totalorder %s183, %s184
    %p193 = scmp.eq.s32.totalorder %s30, 0
    %p194 = por %p192, %p193
    %p195 = scmp.ne.s32.totalorder %s183, %s184
    %p196 = scmp.eq.s32.totalorder %s31, 1
    %p197 = por %p195, %p196
    %p199 = scmp.ne.s32.totalorder %s184, %s198
    %p200 = scmp.eq.s32.totalorder %s31, 0
    %p201 = por %p199, %p200
    %s203 = sadd.s32 %s202, 1
    %p206 = scmp.eq.s32.totalorder %s25, 1
    %p207 = scmp.ne.s32.totalorder %s202, %s204
    %p208 = scmp.eq.s32.totalorder %s25, 0
    %p209 = por %p207, %p208
    %p210 = scmp.ne.s32.totalorder %s202, %s204
    %p211 = scmp.eq.s32.totalorder %s30, 1
    %p212 = por %p210, %p211
    %p213 = scmp.ne.s32.totalorder %s204, %s205
    %p214 = scmp.eq.s32.totalorder %s30, 0
    %p215 = por %p213, %p214
    %p216 = scmp.ne.s32.totalorder %s204, %s205
    %p217 = scmp.eq.s32.totalorder %s31, 1
    %p218 = por %p216, %p217
    %p220 = scmp.ne.s32.totalorder %s205, %s219
    %p221 = scmp.eq.s32.totalorder %s31, 0
    %p222 = por %p220, %p221
    %s224 = sadd.s32 %s223, 1
    %p227 = scmp.eq.s32.totalorder %s25, 1
    %p228 = scmp.ne.s32.totalorder %s223, %s225
    %p229 = scmp.eq.s32.totalorder %s25, 0
    %p230 = por %p228, %p229
    %p231 = scmp.ne.s32.totalorder %s223, %s225
    %p232 = scmp.eq.s32.totalorder %s30, 1
    %p233 = por %p231, %p232
    %p234 = scmp.ne.s32.totalorder %s225, %s226
    %p235 = scmp.eq.s32.totalorder %s30, 0
    %p236 = por %p234, %p235
    %p237 = scmp.ne.s32.totalorder %s225, %s226
    %p238 = scmp.eq.s32.totalorder %s31, 1
    %p239 = por %p237, %p238
    %p241 = scmp.ne.s32.totalorder %s226, %s240
    %p242 = scmp.eq.s32.totalorder %s31, 0
    %p243 = por %p241, %p242
    %s245 = sadd.s32 %s244, 1
    %p248 = scmp.eq.s32.totalorder %s25, 1
    %p249 = scmp.ne.s32.totalorder %s244, %s246
    %p250 = scmp.eq.s32.totalorder %s25, 0
    %p251 = por %p249, %p250
    %p252 = scmp.ne.s32.totalorder %s244, %s246
    %p253 = scmp.eq.s32.totalorder %s30, 1
    %p254 = por %p252, %p253
    %p255 = scmp.ne.s32.totalorder %s246, %s247
    %p256 = scmp.eq.s32.totalorder %s30, 0
    %p257 = por %p255, %p256
    %p258 = scmp.ne.s32.totalorder %s246, %s247
    %p259 = scmp.eq.s32.totalorder %s31, 1
    %p260 = por %p258, %p259
    %p262 = scmp.ne.s32.totalorder %s247, %s261
    %p263 = scmp.eq.s32.totalorder %s31, 0
    %p264 = por %p262, %p263
    %s266 = sadd.s32 %s265, 1
    %p269 = scmp.eq.s32.totalorder %s25, 1
    %p270 = scmp.ne.s32.totalorder %s265, %s267
    %p271 = scmp.eq.s32.totalorder %s25, 0
    %p272 = por %p270, %p271
    %p273 = scmp.ne.s32.totalorder %s265, %s267
    %p274 = scmp.eq.s32.totalorder %s30, 1
    %p275 = por %p273, %p274
    %p276 = scmp.ne.s32.totalorder %s267, %s268
    %p277 = scmp.eq.s32.totalorder %s30, 0
    %p278 = por %p276, %p277
    %p279 = scmp.ne.s32.totalorder %s267, %s268
    %p280 = scmp.eq.s32.totalorder %s31, 1
    %p281 = por %p279, %p280
    %p283 = scmp.ne.s32.totalorder %s268, %s282
    %p284 = scmp.eq.s32.totalorder %s31, 0
    %p285 = por %p283, %p284
    %s287 = sadd.s32 %s286, 1
    %p290 = scmp.eq.s32.totalorder %s25, 1
    %p291 = scmp.ne.s32.totalorder %s286, %s288
    %p292 = scmp.eq.s32.totalorder %s25, 0
    %p293 = por %p291, %p292
    %p294 = scmp.ne.s32.totalorder %s286, %s288
    %p295 = scmp.eq.s32.totalorder %s30, 1
    %p296 = por %p294, %p295
    %p297 = scmp.ne.s32.totalorder %s288, %s289
    %p298 = scmp.eq.s32.totalorder %s30, 0
    %p299 = por %p297, %p298
    %p300 = scmp.ne.s32.totalorder %s288, %s289
    %p301 = scmp.eq.s32.totalorder %s31, 1
    %p302 = por %p300, %p301
    %p304 = scmp.ne.s32.totalorder %s289, %s303
    %p305 = scmp.eq.s32.totalorder %s31, 0
    %p306 = por %p304, %p305
    %s308 = sadd.s32 %s307, 1
    %p311 = scmp.eq.s32.totalorder %s25, 1
    %p312 = scmp.ne.s32.totalorder %s307, %s309
    %p313 = scmp.eq.s32.totalorder %s25, 0
    %p314 = por %p312, %p313
    %p315 = scmp.ne.s32.totalorder %s307, %s309
    %p316 = scmp.eq.s32.totalorder %s30, 1
    %p317 = por %p315, %p316
    %p318 = scmp.ne.s32.totalorder %s309, %s310
    %p319 = scmp.eq.s32.totalorder %s30, 0
    %p320 = por %p318, %p319
    %p321 = scmp.ne.s32.totalorder %s309, %s310
    %p322 = scmp.eq.s32.totalorder %s31, 1
    %p323 = por %p321, %p322
    %p325 = scmp.ne.s32.totalorder %s310, %s324
    %p326 = scmp.eq.s32.totalorder %s31, 0
    %p327 = por %p325, %p326
    %s329 = sadd.s32 %s328, 1
    %p332 = scmp.eq.s32.totalorder %s25, 1
    %p333 = scmp.ne.s32.totalorder %s328, %s330
    %p334 = scmp.eq.s32.totalorder %s25, 0
    %p335 = por %p333, %p334
    %p336 = scmp.ne.s32.totalorder %s328, %s330
    %p337 = scmp.eq.s32.totalorder %s30, 1
    %p338 = por %p336, %p337
    %p339 = scmp.ne.s32.totalorder %s330, %s331
    %p340 = scmp.eq.s32.totalorder %s30, 0
    %p341 = por %p339, %p340
    %p342 = scmp.ne.s32.totalorder %s330, %s331
    %p343 = scmp.eq.s32.totalorder %s31, 1
    %p344 = por %p342, %p343
    %p346 = scmp.ne.s32.totalorder %s331, %s345
    %p347 = scmp.eq.s32.totalorder %s31, 0
    %p348 = por %p346, %p347
    %s350 = sadd.s32 %s349, 1
    %p353 = scmp.eq.s32.totalorder %s25, 1
    %p354 = scmp.ne.s32.totalorder %s349, %s351
    %p355 = scmp.eq.s32.totalorder %s25, 0
    %p356 = por %p354, %p355
    %p357 = scmp.ne.s32.totalorder %s349, %s351
    %p358 = scmp.eq.s32.totalorder %s30, 1
    %p359 = por %p357, %p358
    %p360 = scmp.ne.s32.totalorder %s351, %s352
    %p361 = scmp.eq.s32.totalorder %s30, 0
    %p362 = por %p360, %p361
    %p363 = scmp.ne.s32.totalorder %s351, %s352
    %p364 = scmp.eq.s32.totalorder %s31, 1
    %p365 = por %p363, %p364
    %p367 = scmp.ne.s32.totalorder %s352, %s366
    %p368 = scmp.eq.s32.totalorder %s31, 0
    %p369 = por %p367, %p368
    %s371 = sadd.s32 %s370, 1
    %p374 = scmp.eq.s32.totalorder %s25, 1
    %p375 = scmp.ne.s32.totalorder %s370, %s372
    %p376 = scmp.eq.s32.totalorder %s25, 0
    %p377 = por %p375, %p376
    %p378 = scmp.ne.s32.totalorder %s370, %s372
    %p379 = scmp.eq.s32.totalorder %s30, 1
    %p380 = por %p378, %p379
    %p381 = scmp.ne.s32.totalorder %s372, %s373
    %p382 = scmp.eq.s32.totalorder %s30, 0
    %p383 = por %p381, %p382
    %p384 = scmp.ne.s32.totalorder %s372, %s373
    %p385 = scmp.eq.s32.totalorder %s31, 1
    %p386 = por %p384, %p385
    %p388 = scmp.ne.s32.totalorder %s373, %s387
    %p389 = scmp.eq.s32.totalorder %s31, 0
    %p390 = por %p388, %p389
    %s392 = sadd.s32 %s391, 1
    %p395 = scmp.eq.s32.totalorder %s25, 1
    %p396 = scmp.ne.s32.totalorder %s391, %s393
    %p397 = scmp.eq.s32.totalorder %s25, 0
    %p398 = por %p396, %p397
    %p399 = scmp.ne.s32.totalorder %s391, %s393
    %p400 = scmp.eq.s32.totalorder %s30, 1
    %p401 = por %p399, %p400
    %p402 = scmp.ne.s32.totalorder %s393, %s394
    %p403 = scmp.eq.s32.totalorder %s30, 0
    %p404 = por %p402, %p403
    %p405 = scmp.ne.s32.totalorder %s393, %s394
    %p406 = scmp.eq.s32.totalorder %s31, 1
    %p407 = por %p405, %p406
    %p409 = scmp.ne.s32.totalorder %s394, %s408
    %p410 = scmp.eq.s32.totalorder %s31, 0
    %p411 = por %p409, %p410
    %s413 = sadd.s32 %s412, 1
    %p416 = scmp.eq.s32.totalorder %s25, 1
    %p417 = scmp.ne.s32.totalorder %s412, %s414
    %p418 = scmp.eq.s32.totalorder %s25, 0
    %p419 = por %p417, %p418
    %p420 = scmp.ne.s32.totalorder %s412, %s414
    %p421 = scmp.eq.s32.totalorder %s30, 1
    %p422 = por %p420, %p421
    %p423 = scmp.ne.s32.totalorder %s414, %s415
    %p424 = scmp.eq.s32.totalorder %s30, 0
    %p425 = por %p423, %p424
    %p426 = scmp.ne.s32.totalorder %s414, %s415
    %p427 = scmp.eq.s32.totalorder %s31, 1
    %p428 = por %p426, %p427
    %p430 = scmp.ne.s32.totalorder %s415, %s429
    %p431 = scmp.eq.s32.totalorder %s31, 0
    %p432 = por %p430, %p431
    %s433 = ssub.s32 %s32, %s44
    %s434 = ssub.s32 %s33, %s40
    %s435 = sor.u32 %s433, %s434
    %p436 = scmp.eq.s32.totalorder %s435, 0
    %s438 = sadd.s32 %s437, 1
    %s439 = scalar_select %p436, %s437, %s438
    %p442 = pneg %p436
    %p443 = scmp.eq.s32.totalorder %s25, 1
    %p444 = por %p442, %p443
    %p445 = scmp.ne.s32.totalorder %s437, %s440
    %p446 = scmp.eq.s32.totalorder %s25, 0
    %p447 = por %p445, %p446
    %p448 = scmp.ne.s32.totalorder %s437, %s440
    %p449 = scmp.eq.s32.totalorder %s30, 1
    %p450 = por %p448, %p449
    %p451 = scmp.ne.s32.totalorder %s440, %s441
    %p452 = scmp.eq.s32.totalorder %s30, 0
    %p453 = por %p451, %p452
    %p454 = scmp.ne.s32.totalorder %s440, %s441
    %p455 = scmp.eq.s32.totalorder %s31, 1
    %p456 = por %p454, %p455
    %p458 = scmp.ne.s32.totalorder %s441, %s457
    %p459 = scmp.eq.s32.totalorder %s31, 0
    %p460 = por %p458, %p459
    %s461 = ssub.s32 %s32, %s44
    %s462 = ssub.s32 %s33, %s40
    %s463 = sor.u32 %s461, %s462
    %p464 = scmp.eq.s32.totalorder %s463, 0
    %s466 = sadd.s32 %s465, 1
    %s467 = scalar_select %p464, %s465, %s466
    %p470 = pneg %p464
    %p471 = scmp.eq.s32.totalorder %s25, 1
    %p472 = por %p470, %p471
    %p473 = scmp.ne.s32.totalorder %s465, %s468
    %p474 = scmp.eq.s32.totalorder %s25, 0
    %p475 = por %p473, %p474
    %p476 = scmp.ne.s32.totalorder %s465, %s468
    %p477 = scmp.eq.s32.totalorder %s30, 1
    %p478 = por %p476, %p477
    %p479 = scmp.ne.s32.totalorder %s468, %s469
    %p480 = scmp.eq.s32.totalorder %s30, 0
    %p481 = por %p479, %p480
    %p482 = scmp.ne.s32.totalorder %s468, %s469
    %p483 = scmp.eq.s32.totalorder %s31, 1
    %p484 = por %p482, %p483
    %p486 = scmp.ne.s32.totalorder %s469, %s485
    %p487 = scmp.eq.s32.totalorder %s31, 0
    %p488 = por %p486, %p487
    %p489 = scmp.le.s32.totalorder 1, %s25
    %p490 = scmp.lt.s32.totalorder %s25, 3
    %p491 = pnand %p489, %p490
    %p492 = pneg %p491
    // Predicated region
    $region9: #{unet_attention_block.1} parent=5 // pred_check
      _
    $region10: #{unet_attention_block.1} parent=5 // pred_check_branch
      %494 = sbr.rel (%p491) target = $region12
    $region11: #{unet_attention_block.1} parent=5 // pred_region
      %s495 = ssub.s32 %s25, 1
      // Predicated region
      $region13: #{unet_attention_block.1} parent=11 // pred_check
        %p496 = pneg %p110
      $region14: #{unet_attention_block.1} parent=11 // pred_check_branch
        %498 = sbr.rel (%p496) target = $region16
      $region15: #{unet_attention_block.1} parent=11 // pred_region
        _
      $region16: #{unet_attention_block.1} parent=11 // pred_fallthru
        _
      // Predicated region
      $region17: #{unet_attention_block.1} parent=11 // pred_check
        %p499 = pneg %p131
      $region18: #{unet_attention_block.1} parent=11 // pred_check_branch
        %501 = sbr.rel (%p499) target = $region20
      $region19: #{unet_attention_block.1} parent=11 // pred_region
        _
      $region20: #{unet_attention_block.1} parent=11 // pred_fallthru
        _
      // Predicated region
      $region21: #{unet_attention_block.1} parent=11 // pred_check
        %p502 = pneg %p152
      $region22: #{unet_attention_block.1} parent=11 // pred_check_branch
        %504 = sbr.rel (%p502) target = $region24
      $region23: #{unet_attention_block.1} parent=11 // pred_region
        _
      $region24: #{unet_attention_block.1} parent=11 // pred_fallthru
        _
      // Predicated region
      $region25: #{unet_attention_block.1} parent=11 // pred_check
        %p505 = pneg %p173
      $region26: #{unet_attention_block.1} parent=11 // pred_check_branch
        %507 = sbr.rel (%p505) target = $region28
      $region27: #{unet_attention_block.1} parent=11 // pred_region
        _
      $region28: #{unet_attention_block.1} parent=11 // pred_fallthru
        _
      // Predicated region
      $region29: #{unet_attention_block.1} parent=11 // pred_check
        %p508 = pneg %p194
      $region30: #{unet_attention_block.1} parent=11 // pred_check_branch
        %510 = sbr.rel (%p508) target = $region32
      $region31: #{unet_attention_block.1} parent=11 // pred_region
        _
      $region32: #{unet_attention_block.1} parent=11 // pred_fallthru
        _
      // Predicated region
      $region33: #{unet_attention_block.1} parent=11 // pred_check
        %p511 = pneg %p215
      $region34: #{unet_attention_block.1} parent=11 // pred_check_branch
        %513 = sbr.rel (%p511) target = $region36
      $region35: #{unet_attention_block.1} parent=11 // pred_region
        _
      $region36: #{unet_attention_block.1} parent=11 // pred_fallthru
        _
      // Predicated region
      $region37: #{unet_attention_block.1} parent=11 // pred_check
        %p514 = pneg %p236
      $region38: #{unet_attention_block.1} parent=11 // pred_check_branch
        %516 = sbr.rel (%p514) target = $region40
      $region39: #{unet_attention_block.1} parent=11 // pred_region
        _
      $region40: #{unet_attention_block.1} parent=11 // pred_fallthru
        _
      // Predicated region
      $region41: #{unet_attention_block.1} parent=11 // pred_check
        %p517 = pneg %p257
      $region42: #{unet_attention_block.1} parent=11 // pred_check_branch
        %519 = sbr.rel (%p517) target = $region44
      $region43: #{unet_attention_block.1} parent=11 // pred_region
        _
      $region44: #{unet_attention_block.1} parent=11 // pred_fallthru
        _
      // Predicated region
      $region45: #{unet_attention_block.1} parent=11 // pred_check
        %p520 = pneg %p278
      $region46: #{unet_attention_block.1} parent=11 // pred_check_branch
        %522 = sbr.rel (%p520) target = $region48
      $region47: #{unet_attention_block.1} parent=11 // pred_region
        _
      $region48: #{unet_attention_block.1} parent=11 // pred_fallthru
        _
      // Predicated region
      $region49: #{unet_attention_block.1} parent=11 // pred_check
        %p523 = pneg %p299
      $region50: #{unet_attention_block.1} parent=11 // pred_check_branch
        %525 = sbr.rel (%p523) target = $region52
      $region51: #{unet_attention_block.1} parent=11 // pred_region
        _
      $region52: #{unet_attention_block.1} parent=11 // pred_fallthru
        _
      // Predicated region
      $region53: #{unet_attention_block.1} parent=11 // pred_check
        %p526 = pneg %p320
      $region54: #{unet_attention_block.1} parent=11 // pred_check_branch
        %528 = sbr.rel (%p526) target = $region56
      $region55: #{unet_attention_block.1} parent=11 // pred_region
        _
      $region56: #{unet_attention_block.1} parent=11 // pred_fallthru
        _
      // Predicated region
      $region57: #{unet_attention_block.1} parent=11 // pred_check
        %p529 = pneg %p341
      $region58: #{unet_attention_block.1} parent=11 // pred_check_branch
        %531 = sbr.rel (%p529) target = $region60
      $region59: #{unet_attention_block.1} parent=11 // pred_region
        _
      $region60: #{unet_attention_block.1} parent=11 // pred_fallthru
        _
      // Predicated region
      $region61: #{unet_attention_block.1} parent=11 // pred_check
        %p532 = pneg %p362
      $region62: #{unet_attention_block.1} parent=11 // pred_check_branch
        %534 = sbr.rel (%p532) target = $region64
      $region63: #{unet_attention_block.1} parent=11 // pred_region
        _
      $region64: #{unet_attention_block.1} parent=11 // pred_fallthru
        _
      // Predicated region
      $region65: #{unet_attention_block.1} parent=11 // pred_check
        %p535 = pneg %p383
      $region66: #{unet_attention_block.1} parent=11 // pred_check_branch
        %537 = sbr.rel (%p535) target = $region68
      $region67: #{unet_attention_block.1} parent=11 // pred_region
        _
      $region68: #{unet_attention_block.1} parent=11 // pred_fallthru
        _
      // Predicated region
      $region69: #{unet_attention_block.1} parent=11 // pred_check
        %p538 = pneg %p404
      $region70: #{unet_attention_block.1} parent=11 // pred_check_branch
        %540 = sbr.rel (%p538) target = $region72
      $region71: #{unet_attention_block.1} parent=11 // pred_region
        _
      $region72: #{unet_attention_block.1} parent=11 // pred_fallthru
        _
      // Predicated region
      $region73: #{unet_attention_block.1} parent=11 // pred_check
        %p541 = pneg %p425
      $region74: #{unet_attention_block.1} parent=11 // pred_check_branch
        %543 = sbr.rel (%p541) target = $region76
      $region75: #{unet_attention_block.1} parent=11 // pred_region
        _
      $region76: #{unet_attention_block.1} parent=11 // pred_fallthru
        _
    $region12: #{unet_attention_block.1} parent=5 // pred_fallthru
      _
    %p544 = scmp.lt.s32.totalorder %s25, 2
    // Predicated region
    $region77: #{unet_attention_block.1} parent=5 // pred_check
      %p545 = pneg %p544
    $region78: #{unet_attention_block.1} parent=5 // pred_check_branch
      %547 = sbr.rel (%p545) target = $region80
    $region79: #{unet_attention_block.1} parent=5 // pred_region
      // Predicated region
      $region81: #{unet_attention_block.1} parent=79 // pred_check
        %p548 = pneg %p57
      $region82: #{unet_attention_block.1} parent=79 // pred_check_branch
        %550 = sbr.rel (%p548) target = $region84
      $region83: #{unet_attention_block.1} parent=79 // pred_region
        %p551 = scmp.lt.s32.totalorder %s32, 1
        %s552 = scalar_select %p551, %s32, 1
        %s553 = smul.addr %s552, 4
        %s554 = smul.addr %s553, 8
        %s555 = scalar_lea.vmem %s0, %s554
      $region84: #{unet_attention_block.1} parent=79 // pred_fallthru
        _
      // Predicated region
      $region85: #{unet_attention_block.1} parent=79 // pred_check
        %p556 = pneg %p83
      $region86: #{unet_attention_block.1} parent=79 // pred_check_branch
        %558 = sbr.rel (%p556) target = $region88
      $region87: #{unet_attention_block.1} parent=79 // pred_region
        %p559 = scmp.lt.s32.totalorder %s32, 1
        %s560 = scalar_select %p559, %s32, 1
        %s561 = smul.addr %s560, 4
        %s562 = smul.addr %s561, 8
        %s563 = scalar_lea.vmem %s1, %s562
      $region88: #{unet_attention_block.1} parent=79 // pred_fallthru
        _
      // Predicated region
      $region89: #{unet_attention_block.1} parent=79 // pred_check
        %p564 = pneg %p447
      $region90: #{unet_attention_block.1} parent=79 // pred_check_branch
        %566 = sbr.rel (%p564) target = $region92
      $region91: #{unet_attention_block.1} parent=79 // pred_region
        %s567 = smul.u32 2, %s33
        %p568 = scmp.lt.s32.totalorder %s32, 1
        %s569 = scalar_select %p568, %s32, 1
        %p570 = scmp.lt.s32.totalorder %s567, 1
        %s571 = scalar_select %p570, %s567, 1
        %s572 = smul.addr %s569, 8
        %s573 = sadd.s32 %s571, %s572
        %s574 = smul.addr %s573, 8
        %s575 = scalar_lea.vmem %s18, %s574
        %s576 = smul.u32 2, %s33
      $region92: #{unet_attention_block.1} parent=79 // pred_fallthru
        _
    $region80: #{unet_attention_block.1} parent=5 // pred_fallthru
      _
    %p577 = scmp.le.s32.totalorder 1, %s25
    %p578 = scmp.lt.s32.totalorder %s25, 3
    %p579 = pnand %p577, %p578
    %p580 = pneg %p579
    // Predicated region
    $region93: #{unet_attention_block.1} parent=5 // pred_check
      _
    $region94: #{unet_attention_block.1} parent=5 // pred_check_branch
      %582 = sbr.rel (%p579) target = $region96
    $region95: #{unet_attention_block.1} parent=5 // pred_region
      %s583 = ssub.s32 %s25, 1
      %p584 = scmp.lt.s32.totalorder %s34, 1
      %s585 = scalar_select %p584, %s34, 1
      %s586 = smul.addr %s585, 4
      %s587 = smul.addr %s586, 8
      %s588 = scalar_lea.vmem %s0, %s587
      %p589 = pneg %p63
      %p590 = pneg %p60
      %p591 = scmp.lt.s32.totalorder %s34, 1
      %s592 = scalar_select %p591, %s34, 1
      %s593 = smul.addr %s592, 4
      %s594 = smul.addr %s593, 8
      %s595 = scalar_lea.vmem %s1, %s594
      %p596 = pneg %p89
      %p597 = pneg %p86
      %p598 = pneg %p110
      %p599 = pneg %p107
      %p600 = pneg %p131
      %p601 = pneg %p128
      %p602 = pneg %p152
      %p603 = pneg %p149
      %p604 = pneg %p173
      %p605 = pneg %p170
      %p606 = pneg %p194
      %p607 = pneg %p191
      %p608 = pneg %p215
      %p609 = pneg %p212
      %p610 = pneg %p236
      %p611 = pneg %p233
      %p612 = pneg %p257
      %p613 = pneg %p254
      %p614 = pneg %p278
      %p615 = pneg %p275
      %p616 = pneg %p299
      %p617 = pneg %p296
      %p618 = pneg %p320
      %p619 = pneg %p317
      %p620 = pneg %p341
      %p621 = pneg %p338
      %p622 = pneg %p362
      %p623 = pneg %p359
      %p624 = pneg %p383
      %p625 = pneg %p380
      %p626 = pneg %p404
      %p627 = pneg %p401
      %p628 = pneg %p425
      %p629 = pneg %p422
      %s630 = smul.u32 2, %s35
      %p631 = scmp.lt.s32.totalorder %s34, 1
      %s632 = scalar_select %p631, %s34, 1
      %p633 = scmp.lt.s32.totalorder %s630, 1
      %s634 = scalar_select %p633, %s630, 1
      %s635 = smul.addr %s632, 8
      %s636 = sadd.s32 %s634, %s635
      %s637 = smul.addr %s636, 8
      %s638 = scalar_lea.vmem %s18, %s637
      %p639 = pneg %p453
      %p640 = pneg %p450
      %p641 = pneg %p481
      %p642 = pneg %p478
      %s643 = smul.u32 2, %s35
      %p644 = scmp.lt.s32.totalorder %s34, 1
      %s645 = scalar_select %p644, %s34, 1
      %p646 = scmp.lt.s32.totalorder %s643, 1
      %s647 = scalar_select %p646, %s643, 1
      %s648 = smul.addr %s645, 8
      %s649 = sadd.s32 %s647, %s648
      %s650 = smul.addr %s649, 8
      %s651 = scalar_lea.vmem %s19, %s650
      %p652 = scmp.lt.s32.totalorder %s34, 1
      %s653 = scalar_select %p652, %s34, 1
      %s654 = smul.addr %s653, 4
      %s655 = smul.addr %s654, 8
      %s656 = scalar_lea.vmem %s0, %s655
      %p657 = scmp.lt.s32.totalorder %s34, 1
      %s658 = scalar_select %p657, %s34, 1
      %s659 = smul.addr %s658, 4
      %s660 = smul.addr %s659, 8
      %s661 = scalar_lea.vmem %s1, %s660
      %s662 = smul.u32 2, %s35
      %p663 = scmp.lt.s32.totalorder %s34, 1
      %s664 = scalar_select %p663, %s34, 1
      %p665 = scmp.lt.s32.totalorder %s662, 1
      %s666 = scalar_select %p665, %s662, 1
      %s667 = smul.addr %s664, 8
      %s668 = sadd.s32 %s666, %s667
      %s669 = smul.addr %s668, 8
      %s670 = scalar_lea.vmem %s18, %s669
      %s671 = smul.u32 2, %s35
      %s672 = smul.u32 2, %s35
      %p673 = scmp.lt.s32.totalorder %s34, 1
      %s674 = scalar_select %p673, %s34, 1
      %p675 = scmp.lt.s32.totalorder %s672, 1
      %s676 = scalar_select %p675, %s672, 1
      %s677 = smul.addr %s674, 8
      %s678 = sadd.s32 %s676, %s677
      %s679 = smul.addr %s678, 8
      %s680 = scalar_lea.vmem %s19, %s679
      %s681 = smul.u32 2, %s35
      %v683 = vld [vmem:[%s670] sm:$0xff]
      %v684 = vld [vmem:[%s670 + $0x8] sm:$0xff]
      %v685 = vld [vmem:[%s670 + $0x10] sm:$0xff]
      %v686 = vld [vmem:[%s670 + $0x18] sm:$0xff]
      %v687 = vld [vmem:[%s670 + $0x20] sm:$0xff]
      %v688 = vld [vmem:[%s670 + $0x28] sm:$0xff]
      %v689 = vld [vmem:[%s670 + $0x30] sm:$0xff]
      %v690 = vld [vmem:[%s670 + $0x38] sm:$0xff]
      %v691 = vld [vmem:[%s656] sm:$0xff]
      %v692 = vld [vmem:[%s656 + $0x8] sm:$0xff]
      %v693 = vld [vmem:[%s656 + $0x10] sm:$0xff]
      %v694 = vld [vmem:[%s656 + $0x18] sm:$0xff]
      %696 = vset.pattern.permute.xlu0 0
      %697 = vperm.xlu0 %696, %v691
      %v698 = vpop.permute.xlu0 %697
      %701 = vset.pattern.permute.xlu0 0
      %702 = vperm.xlu0 %701, %v692
      %v703 = vpop.permute.xlu0 %702
      %706 = vset.pattern.permute.xlu0 0
      %707 = vperm.xlu0 %706, %v693
      %v708 = vpop.permute.xlu0 %707
      %711 = vset.pattern.permute.xlu0 0
      %712 = vperm.xlu0 %711, %v694
      %v713 = vpop.permute.xlu0 %712
      %v715 = vmul.f32 %v683, %v698
      %v716 = vmul.f32 %v684, %v698
      %v717 = vmul.f32 %v685, %v703
      %v718 = vmul.f32 %v686, %v703
      %v719 = vmul.f32 %v687, %v708
      %v720 = vmul.f32 %v688, %v708
      %v721 = vmul.f32 %v689, %v713
      %v722 = vmul.f32 %v690, %v713
      %v723 = vld [vmem:[%s661] sm:$0xff]
      %v724 = vld [vmem:[%s661 + $0x8] sm:$0xff]
      %v725 = vld [vmem:[%s661 + $0x10] sm:$0xff]
      %v726 = vld [vmem:[%s661 + $0x18] sm:$0xff]
      %728 = vset.pattern.permute.xlu0 0
      %729 = vperm.xlu0 %728, %v723
      %v730 = vpop.permute.xlu0 %729
      %733 = vset.pattern.permute.xlu0 0
      %734 = vperm.xlu0 %733, %v724
      %v735 = vpop.permute.xlu0 %734
      %738 = vset.pattern.permute.xlu0 0
      %739 = vperm.xlu0 %738, %v725
      %v740 = vpop.permute.xlu0 %739
      %743 = vset.pattern.permute.xlu0 0
      %744 = vperm.xlu0 %743, %v726
      %v745 = vpop.permute.xlu0 %744
      %v747 = vadd.f32 %v715, %v730
      %v748 = vadd.f32 %v716, %v730
      %v749 = vadd.f32 %v717, %v735
      %v750 = vadd.f32 %v718, %v735
      %v751 = vadd.f32 %v719, %v740
      %v752 = vadd.f32 %v720, %v740
      %v753 = vadd.f32 %v721, %v745
      %v754 = vadd.f32 %v722, %v745
      %v755 = vld [vmem:[%s2] sm:$0xf]
      %v756 = vld [vmem:[%s2 + $0x4] sm:$0xf]
      %v757 = vld [vmem:[%s2 + $0x8] sm:$0xf]
      %v758 = vld [vmem:[%s2 + $0xc] sm:$0xf]
      %v759 = vpack.c.bf16 %v749, %v747
      %v760 = vpack.c.bf16 %v750, %v748
      %v761 = vpack.c.bf16 %v753, %v751
      %v762 = vpack.c.bf16 %v754, %v752
      %v763 = vld [vmem:[%s3] sm:$0xff]
      %v764 = vld [vmem:[%s3 + $0x8] sm:$0xff]
      %v765 = vld [vmem:[%s3 + $0x10] sm:$0xff]
      %v766 = vld [vmem:[%s3 + $0x18] sm:$0xff]
      %768 = vset.pattern.permute.xlu0 0
      %769 = vperm.xlu0 %768, %v763
      %v770 = vpop.permute.xlu0 %769
      %773 = vset.pattern.permute.xlu0 0
      %774 = vperm.xlu0 %773, %v764
      %v775 = vpop.permute.xlu0 %774
      %778 = vset.pattern.permute.xlu0 0
      %779 = vperm.xlu0 %778, %v765
      %v780 = vpop.permute.xlu0 %779
      %783 = vset.pattern.permute.xlu0 0
      %784 = vperm.xlu0 %783, %v766
      %v785 = vpop.permute.xlu0 %784
      %v791 = vunpack.c.l.b16 %v755
      %v792 = vunpack.c.l.b16 %v756
      %v793 = vunpack.c.l.b16 %v757
      %v794 = vunpack.c.l.b16 %v758
      %v795 = vpack.c.b16 %v792, %v791
      %v796 = vpack.c.b16 %v794, %v793
      %vm797 = vcmask 261120
      %v799 = vsel %vm797, %v795, 0
      %v802 = vsel %vm797, %v796, 0
      %804 = vmatprep.subr.bf16.mxu0 %v760
      %805 = vmatpush1.bf16.msra.mxu0 %v759
      %806 = vmatprep.subr.bf16.mxu0 %v762
      %807 = vmatpush1.bf16.msra.mxu0 %v761
      %808 = vmatprep.subr.bf16.mxu0 0
      %809 = vmatpush1.bf16.msra.mxu0 0
      %810 = vmatprep.subr.bf16.mxu0 0
      %811 = vmatpush1.bf16.msra.mxu0 0
      %812 = vmatprep.subr.bf16.mxu0 0
      %813 = vmatpush1.bf16.msra.mxu0 0
      %814 = vmatprep.subr.bf16.mxu0 0
      %815 = vmatpush1.bf16.msra.mxu0 0
      %816 = vmatprep.subr.bf16.mxu0 0
      %817 = vmatpush1.bf16.msra.mxu0 0
      %818 = vmatprep.subr.bf16.mxu0 0
      %819 = vmatpush1.bf16.msra.mxu0 0
      %820 = vmatprep.subr.bf16.mxu0 0
      %821 = vmatpush1.bf16.msra.mxu0 0
      %822 = vmatprep.subr.bf16.mxu0 0
      %823 = vmatpush1.bf16.msra.mxu0 0
      %824 = vmatprep.subr.bf16.mxu0 0
      %825 = vmatpush1.bf16.msra.mxu0 0
      %826 = vmatprep.subr.bf16.mxu0 0
      %827 = vmatpush1.bf16.msra.mxu0 0
      %828 = vmatprep.subr.bf16.mxu0 0
      %829 = vmatpush1.bf16.msra.mxu0 0
      %830 = vmatprep.subr.bf16.mxu0 0
      %831 = vmatpush1.bf16.msra.mxu0 0
      %832 = vmatprep.subr.bf16.mxu0 0
      %833 = vmatpush1.bf16.msra.mxu0 0
      %834 = vmatprep.subr.bf16.mxu0 0
      %835 = vmatpush1.bf16.msra.mxu0 0
      %836 = vmatprep.mubr.bf16.mxu0 0
      %837 = vmatmul.mubr.bf16.gmra.mrb[0].mxu0 %v799
      %v838 = vpop.f32.mrb[0].mxu0
      %v839 = vadd.f32 %v770, %v838
      %v840 = vpop.f32.mrb[0].mxu0
      %v841 = vadd.f32 %v770, %v840
      %v842 = vpop.f32.mrb[0].mxu0
      %v843 = vadd.f32 %v775, %v842
      %v844 = vpop.f32.mrb[0].mxu0
      %v845 = vadd.f32 %v775, %v844
      %846 = vmatprep.mubr.bf16.mxu0 0
      %847 = vmatmul.mubr.bf16.gmra.mrb[0].mxu0 %v802
      %v848 = vpop.f32.mrb[0].mxu0
      %v849 = vadd.f32 %v780, %v848
      %v850 = vpop.f32.mrb[0].mxu0
      %v851 = vadd.f32 %v780, %v850
      %v852 = vpop.f32.mrb[0].mxu0
      %v853 = vadd.f32 %v785, %v852
      %v854 = vpop.f32.mrb[0].mxu0
      %v855 = vadd.f32 %v785, %v854
      %856 = vdwg.mxu0
      %v857 = vadd.f32 %v839, %v843
      %v858 = vadd.f32 %v857, %v849
      %v859 = vadd.f32 %v858, %v853
      %v860 = vrot.slane %v859, 4
      %v861 = vadd.f32 %v859, %v860
      %v862 = vrot.slane %v861, 2
      %v863 = vadd.f32 %v861, %v862
      %v864 = vrot.slane %v863, 1
      %v865 = vadd.f32 %v863, %v864
      %v866 = vadd.f32 %v841, %v845
      %v867 = vadd.f32 %v866, %v851
      %v868 = vadd.f32 %v867, %v855
      %v869 = vrot.slane %v868, 4
      %v870 = vadd.f32 %v868, %v869
      %v871 = vrot.slane %v870, 2
      %v872 = vadd.f32 %v870, %v871
      %v873 = vrot.slane %v872, 1
      %v874 = vadd.f32 %v872, %v873
      %v875 = vrcp.pop 32.0
      %v876 = vmul.f32 %v865, %v875
      %v877 = vmul.f32 %v874, %v875
      %v878 = vsub.f32 %v839, %v876
      %v879 = vsub.f32 %v841, %v877
      %v880 = vsub.f32 %v843, %v876
      %v881 = vsub.f32 %v845, %v877
      %v882 = vsub.f32 %v849, %v876
      %v883 = vsub.f32 %v851, %v877
      %v884 = vsub.f32 %v853, %v876
      %v885 = vsub.f32 %v855, %v877
      %v886 = vmul.f32 %v878, %v878
      %v887 = vmul.f32 %v879, %v879
      %v888 = vmul.f32 %v880, %v880
      %v889 = vmul.f32 %v881, %v881
      %v890 = vmul.f32 %v882, %v882
      %v891 = vmul.f32 %v883, %v883
      %v892 = vmul.f32 %v884, %v884
      %v893 = vmul.f32 %v885, %v885
      %v894 = vadd.f32 %v886, %v888
      %v895 = vadd.f32 %v894, %v890
      %v896 = vadd.f32 %v895, %v892
      %v897 = vrot.slane %v896, 4
      %v898 = vadd.f32 %v896, %v897
      %v899 = vrot.slane %v898, 2
      %v900 = vadd.f32 %v898, %v899
      %v901 = vrot.slane %v900, 1
      %v902 = vadd.f32 %v900, %v901
      %v903 = vadd.f32 %v887, %v889
      %v904 = vadd.f32 %v903, %v891
      %v905 = vadd.f32 %v904, %v893
      %v906 = vrot.slane %v905, 4
      %v907 = vadd.f32 %v905, %v906
      %v908 = vrot.slane %v907, 2
      %v909 = vadd.f32 %v907, %v908
      %v910 = vrot.slane %v909, 1
      %v911 = vadd.f32 %v909, %v910
      %v912 = vmul.f32 %v902, %v875
      %v913 = vmul.f32 %v911, %v875
      %v914 = vadd.f32 %v912, 1e-05
      %v915 = vadd.f32 %v913, 1e-05
      %v916 = vrsqrt.pop %v914
      %v917 = vrsqrt.pop %v915
      %v918 = vmul.f32 %v878, %v916
      %v919 = vmul.f32 %v879, %v917
      %v920 = vmul.f32 %v880, %v916
      %v921 = vmul.f32 %v881, %v917
      %v922 = vmul.f32 %v882, %v916
      %v923 = vmul.f32 %v883, %v917
      %v924 = vmul.f32 %v884, %v916
      %v925 = vmul.f32 %v885, %v917
      %v926 = vld [vmem:[%s4] sm:$0xff]
      %v927 = vld [vmem:[%s4 + $0x8] sm:$0xff]
      %v928 = vld [vmem:[%s4 + $0x10] sm:$0xff]
      %v929 = vld [vmem:[%s4 + $0x18] sm:$0xff]
      %931 = vset.pattern.permute.xlu0 0
      %932 = vperm.xlu0 %931, %v926
      %v933 = vpop.permute.xlu0 %932
      %936 = vset.pattern.permute.xlu0 0
      %937 = vperm.xlu0 %936, %v927
      %v938 = vpop.permute.xlu0 %937
      %941 = vset.pattern.permute.xlu0 0
      %942 = vperm.xlu0 %941, %v928
      %v943 = vpop.permute.xlu0 %942
      %946 = vset.pattern.permute.xlu0 0
      %947 = vperm.xlu0 %946, %v929
      %v948 = vpop.permute.xlu0 %947
      %v950 = vmul.f32 %v918, %v933
      %v951 = vmul.f32 %v919, %v933
      %v952 = vmul.f32 %v920, %v938
      %v953 = vmul.f32 %v921, %v938
      %v954 = vmul.f32 %v922, %v943
      %v955 = vmul.f32 %v923, %v943
      %v956 = vmul.f32 %v924, %v948
      %v957 = vmul.f32 %v925, %v948
      %v958 = vld [vmem:[%s5] sm:$0xff]
      %v959 = vld [vmem:[%s5 + $0x8] sm:$0xff]
      %v960 = vld [vmem:[%s5 + $0x10] sm:$0xff]
      %v961 = vld [vmem:[%s5 + $0x18] sm:$0xff]
      %963 = vset.pattern.permute.xlu0 0
      %964 = vperm.xlu0 %963, %v958
      %v965 = vpop.permute.xlu0 %964
      %968 = vset.pattern.permute.xlu0 0
      %969 = vperm.xlu0 %968, %v959
      %v970 = vpop.permute.xlu0 %969
      %973 = vset.pattern.permute.xlu0 0
      %974 = vperm.xlu0 %973, %v960
      %v975 = vpop.permute.xlu0 %974
      %978 = vset.pattern.permute.xlu0 0
      %979 = vperm.xlu0 %978, %v961
      %v980 = vpop.permute.xlu0 %979
      %v982 = vadd.f32 %v950, %v965
      %v983 = vadd.f32 %v951, %v965
      %v984 = vadd.f32 %v952, %v970
      %v985 = vadd.f32 %v953, %v970
      %v986 = vadd.f32 %v954, %v975
      %v987 = vadd.f32 %v955, %v975
      %v988 = vadd.f32 %v956, %v980
      %v989 = vadd.f32 %v957, %v980
      %v990 = vadd.f32 %v982, %v839
      %v991 = vadd.f32 %v983, %v841
      %v992 = vadd.f32 %v984, %v843
      %v993 = vadd.f32 %v985, %v845
      %v994 = vadd.f32 %v986, %v849
      %v995 = vadd.f32 %v987, %v851
      %v996 = vadd.f32 %v988, %v853
      %v997 = vadd.f32 %v989, %v855
      %v998 = vadd.f32 %v990, %v992
      %v999 = vadd.f32 %v998, %v994
      %v1000 = vadd.f32 %v999, %v996
      %v1001 = vrot.slane %v1000, 4
      %v1002 = vadd.f32 %v1000, %v1001
      %v1003 = vrot.slane %v1002, 2
      %v1004 = vadd.f32 %v1002, %v1003
      %v1005 = vrot.slane %v1004, 1
      %v1006 = vadd.f32 %v1004, %v1005
      %v1007 = vadd.f32 %v991, %v993
      %v1008 = vadd.f32 %v1007, %v995
      %v1009 = vadd.f32 %v1008, %v997
      %v1010 = vrot.slane %v1009, 4
      %v1011 = vadd.f32 %v1009, %v1010
      %v1012 = vrot.slane %v1011, 2
      %v1013 = vadd.f32 %v1011, %v1012
      %v1014 = vrot.slane %v1013, 1
      %v1015 = vadd.f32 %v1013, %v1014
      %v1016 = vmul.f32 %v1006, %v875
      %v1017 = vmul.f32 %v1015, %v875
      %v1018 = vsub.f32 %v990, %v1016
      %v1019 = vsub.f32 %v991, %v1017
      %v1020 = vsub.f32 %v992, %v1016
      %v1021 = vsub.f32 %v993, %v1017
      %v1022 = vsub.f32 %v994, %v1016
      %v1023 = vsub.f32 %v995, %v1017
      %v1024 = vsub.f32 %v996, %v1016
      %v1025 = vsub.f32 %v997, %v1017
      %v1026 = vmul.f32 %v1018, %v1018
      %v1027 = vmul.f32 %v1019, %v1019
      %v1028 = vmul.f32 %v1020, %v1020
      %v1029 = vmul.f32 %v1021, %v1021
      %v1030 = vmul.f32 %v1022, %v1022
      %v1031 = vmul.f32 %v1023, %v1023
      %v1032 = vmul.f32 %v1024, %v1024
      %v1033 = vmul.f32 %v1025, %v1025
      %v1034 = vadd.f32 %v1026, %v1028
      %v1035 = vadd.f32 %v1034, %v1030
      %v1036 = vadd.f32 %v1035, %v1032
      %v1037 = vrot.slane %v1036, 4
      %v1038 = vadd.f32 %v1036, %v1037
      %v1039 = vrot.slane %v1038, 2
      %v1040 = vadd.f32 %v1038, %v1039
      %v1041 = vrot.slane %v1040, 1
      %v1042 = vadd.f32 %v1040, %v1041
      %v1043 = vadd.f32 %v1027, %v1029
      %v1044 = vadd.f32 %v1043, %v1031
      %v1045 = vadd.f32 %v1044, %v1033
      %v1046 = vrot.slane %v1045, 4
      %v1047 = vadd.f32 %v1045, %v1046
      %v1048 = vrot.slane %v1047, 2
      %v1049 = vadd.f32 %v1047, %v1048
      %v1050 = vrot.slane %v1049, 1
      %v1051 = vadd.f32 %v1049, %v1050
      %v1052 = vmul.f32 %v1042, %v875
      %v1053 = vmul.f32 %v1051, %v875
      %v1054 = vadd.f32 %v1052, 1e-05
      %v1055 = vadd.f32 %v1053, 1e-05
      %v1056 = vrsqrt.pop %v1054
      %v1057 = vrsqrt.pop %v1055
      %v1058 = vmul.f32 %v1018, %v1056
      %v1059 = vmul.f32 %v1019, %v1057
      %v1060 = vmul.f32 %v1020, %v1056
      %v1061 = vmul.f32 %v1021, %v1057
      %v1062 = vmul.f32 %v1022, %v1056
      %v1063 = vmul.f32 %v1023, %v1057
      %v1064 = vmul.f32 %v1024, %v1056
      %v1065 = vmul.f32 %v1025, %v1057
      %v1066 = vld [vmem:[%s6] sm:$0xff]
      %v1067 = vld [vmem:[%s6 + $0x8] sm:$0xff]
      %v1068 = vld [vmem:[%s6 + $0x10] sm:$0xff]
      %v1069 = vld [vmem:[%s6 + $0x18] sm:$0xff]
      %1071 = vset.pattern.permute.xlu0 0
      %1072 = vperm.xlu0 %1071, %v1066
      %v1073 = vpop.permute.xlu0 %1072
      %1076 = vset.pattern.permute.xlu0 0
      %1077 = vperm.xlu0 %1076, %v1067
      %v1078 = vpop.permute.xlu0 %1077
      %1081 = vset.pattern.permute.xlu0 0
      %1082 = vperm.xlu0 %1081, %v1068
      %v1083 = vpop.permute.xlu0 %1082
      %1086 = vset.pattern.permute.xlu0 0
      %1087 = vperm.xlu0 %1086, %v1069
      %v1088 = vpop.permute.xlu0 %1087
      %v1090 = vmul.f32 %v1058, %v1073
      %v1091 = vmul.f32 %v1059, %v1073
      %v1092 = vmul.f32 %v1060, %v1078
      %v1093 = vmul.f32 %v1061, %v1078
      %v1094 = vmul.f32 %v1062, %v1083
      %v1095 = vmul.f32 %v1063, %v1083
      %v1096 = vmul.f32 %v1064, %v1088
      %v1097 = vmul.f32 %v1065, %v1088
      %v1098 = vld [vmem:[%s7] sm:$0xff]
      %v1099 = vld [vmem:[%s7 + $0x8] sm:$0xff]
      %v1100 = vld [vmem:[%s7 + $0x10] sm:$0xff]
      %v1101 = vld [vmem:[%s7 + $0x18] sm:$0xff]
      %1103 = vset.pattern.permute.xlu0 0
      %1104 = vperm.xlu0 %1103, %v1098
      %v1105 = vpop.permute.xlu0 %1104
      %1108 = vset.pattern.permute.xlu0 0
      %1109 = vperm.xlu0 %1108, %v1099
      %v1110 = vpop.permute.xlu0 %1109
      %1113 = vset.pattern.permute.xlu0 0
      %1114 = vperm.xlu0 %1113, %v1100
      %v1115 = vpop.permute.xlu0 %1114
      %1118 = vset.pattern.permute.xlu0 0
      %1119 = vperm.xlu0 %1118, %v1101
      %v1120 = vpop.permute.xlu0 %1119
      %v1122 = vadd.f32 %v1090, %v1105
      %v1123 = vadd.f32 %v1091, %v1105
      %v1124 = vadd.f32 %v1092, %v1110
      %v1125 = vadd.f32 %v1093, %v1110
      %v1126 = vadd.f32 %v1094, %v1115
      %v1127 = vadd.f32 %v1095, %v1115
      %v1128 = vadd.f32 %v1096, %v1120
      %v1129 = vadd.f32 %v1097, %v1120
      %v1130 = vadd.f32 %v1122, %v990
      %v1131 = vadd.f32 %v1123, %v991
      %v1132 = vadd.f32 %v1124, %v992
      %v1133 = vadd.f32 %v1125, %v993
      %v1134 = vadd.f32 %v1126, %v994
      %v1135 = vadd.f32 %v1127, %v995
      %v1136 = vadd.f32 %v1128, %v996
      %v1137 = vadd.f32 %v1129, %v997
      %v1138 = vadd.f32 %v1130, %v1132
      %v1139 = vadd.f32 %v1138, %v1134
      %v1140 = vadd.f32 %v1139, %v1136
      %v1141 = vrot.slane %v1140, 4
      %v1142 = vadd.f32 %v1140, %v1141
      %v1143 = vrot.slane %v1142, 2
      %v1144 = vadd.f32 %v1142, %v1143
      %v1145 = vrot.slane %v1144, 1
      %v1146 = vadd.f32 %v1144, %v1145
      %v1147 = vadd.f32 %v1131, %v1133
      %v1148 = vadd.f32 %v1147, %v1135
      %v1149 = vadd.f32 %v1148, %v1137
      %v1150 = vrot.slane %v1149, 4
      %v1151 = vadd.f32 %v1149, %v1150
      %v1152 = vrot.slane %v1151, 2
      %v1153 = vadd.f32 %v1151, %v1152
      %v1154 = vrot.slane %v1153, 1
      %v1155 = vadd.f32 %v1153, %v1154
      %v1156 = vmul.f32 %v1146, %v875
      %v1157 = vmul.f32 %v1155, %v875
      %v1158 = vsub.f32 %v1130, %v1156
      %v1159 = vsub.f32 %v1131, %v1157
      %v1160 = vsub.f32 %v1132, %v1156
      %v1161 = vsub.f32 %v1133, %v1157
      %v1162 = vsub.f32 %v1134, %v1156
      %v1163 = vsub.f32 %v1135, %v1157
      %v1164 = vsub.f32 %v1136, %v1156
      %v1165 = vsub.f32 %v1137, %v1157
      %v1166 = vmul.f32 %v1158, %v1158
      %v1167 = vmul.f32 %v1159, %v1159
      %v1168 = vmul.f32 %v1160, %v1160
      %v1169 = vmul.f32 %v1161, %v1161
      %v1170 = vmul.f32 %v1162, %v1162
      %v1171 = vmul.f32 %v1163, %v1163
      %v1172 = vmul.f32 %v1164, %v1164
      %v1173 = vmul.f32 %v1165, %v1165
      %v1174 = vadd.f32 %v1166, %v1168
      %v1175 = vadd.f32 %v1174, %v1170
      %v1176 = vadd.f32 %v1175, %v1172
      %v1177 = vrot.slane %v1176, 4
      %v1178 = vadd.f32 %v1176, %v1177
      %v1179 = vrot.slane %v1178, 2
      %v1180 = vadd.f32 %v1178, %v1179
      %v1181 = vrot.slane %v1180, 1
      %v1182 = vadd.f32 %v1180, %v1181
      %v1183 = vadd.f32 %v1167, %v1169
      %v1184 = vadd.f32 %v1183, %v1171
      %v1185 = vadd.f32 %v1184, %v1173
      %v1186 = vrot.slane %v1185, 4
      %v1187 = vadd.f32 %v1185, %v1186
      %v1188 = vrot.slane %v1187, 2
      %v1189 = vadd.f32 %v1187, %v1188
      %v1190 = vrot.slane %v1189, 1
      %v1191 = vadd.f32 %v1189, %v1190
      %v1192 = vmul.f32 %v1182, %v875
      %v1193 = vmul.f32 %v1191, %v875
      %v1194 = vadd.f32 %v1192, 1e-05
      %v1195 = vadd.f32 %v1193, 1e-05
      %v1196 = vrsqrt.pop %v1194
      %v1197 = vrsqrt.pop %v1195
      %v1198 = vmul.f32 %v1158, %v1196
      %v1199 = vmul.f32 %v1159, %v1197
      %v1200 = vmul.f32 %v1160, %v1196
      %v1201 = vmul.f32 %v1161, %v1197
      %v1202 = vmul.f32 %v1162, %v1196
      %v1203 = vmul.f32 %v1163, %v1197
      %v1204 = vmul.f32 %v1164, %v1196
      %v1205 = vmul.f32 %v1165, %v1197
      %v1206 = vld [vmem:[%s8] sm:$0xff]
      %v1207 = vld [vmem:[%s8 + $0x8] sm:$0xff]
      %v1208 = vld [vmem:[%s8 + $0x10] sm:$0xff]
      %v1209 = vld [vmem:[%s8 + $0x18] sm:$0xff]
      %1211 = vset.pattern.permute.xlu0 0
      %1212 = vperm.xlu0 %1211, %v1206
      %v1213 = vpop.permute.xlu0 %1212
      %1216 = vset.pattern.permute.xlu0 0
      %1217 = vperm.xlu0 %1216, %v1207
      %v1218 = vpop.permute.xlu0 %1217
      %1221 = vset.pattern.permute.xlu0 0
      %1222 = vperm.xlu0 %1221, %v1208
      %v1223 = vpop.permute.xlu0 %1222
      %1226 = vset.pattern.permute.xlu0 0
      %1227 = vperm.xlu0 %1226, %v1209
      %v1228 = vpop.permute.xlu0 %1227
      %v1230 = vmul.f32 %v1198, %v1213
      %v1231 = vmul.f32 %v1199, %v1213
      %v1232 = vmul.f32 %v1200, %v1218
      %v1233 = vmul.f32 %v1201, %v1218
      %v1234 = vmul.f32 %v1202, %v1223
      %v1235 = vmul.f32 %v1203, %v1223
      %v1236 = vmul.f32 %v1204, %v1228
      %v1237 = vmul.f32 %v1205, %v1228
      %v1238 = vld [vmem:[%s9] sm:$0xff]
      %v1239 = vld [vmem:[%s9 + $0x8] sm:$0xff]
      %v1240 = vld [vmem:[%s9 + $0x10] sm:$0xff]
      %v1241 = vld [vmem:[%s9 + $0x18] sm:$0xff]
      %1243 = vset.pattern.permute.xlu0 0
      %1244 = vperm.xlu0 %1243, %v1238
      %v1245 = vpop.permute.xlu0 %1244
      %1248 = vset.pattern.permute.xlu0 0
      %1249 = vperm.xlu0 %1248, %v1239
      %v1250 = vpop.permute.xlu0 %1249
      %1253 = vset.pattern.permute.xlu0 0
      %1254 = vperm.xlu0 %1253, %v1240
      %v1255 = vpop.permute.xlu0 %1254
      %1258 = vset.pattern.permute.xlu0 0
      %1259 = vperm.xlu0 %1258, %v1241
      %v1260 = vpop.permute.xlu0 %1259
      %v1262 = vadd.f32 %v1230, %v1245
      %v1263 = vadd.f32 %v1231, %v1245
      %v1264 = vadd.f32 %v1232, %v1250
      %v1265 = vadd.f32 %v1233, %v1250
      %v1266 = vadd.f32 %v1234, %v1255
      %v1267 = vadd.f32 %v1235, %v1255
      %v1268 = vadd.f32 %v1236, %v1260
      %v1269 = vadd.f32 %v1237, %v1260
      %v1270 = vpack.c.bf16 %v1264, %v1262
      %v1271 = vpack.c.bf16 %v1265, %v1263
      %v1272 = vpack.c.bf16 %v1268, %v1266
      %v1273 = vpack.c.bf16 %v1269, %v1267
      %v1274 = vld [vmem:[%s10] sm:$0xf]
      %v1275 = vld [vmem:[%s10 + $0x4] sm:$0xf]
      %v1276 = vld [vmem:[%s10 + $0x8] sm:$0xf]
      %v1277 = vld [vmem:[%s10 + $0xc] sm:$0xf]
      %v1278 = vld [vmem:[%s10 + $0x10] sm:$0xf]
      %v1279 = vld [vmem:[%s10 + $0x14] sm:$0xf]
      %v1280 = vld [vmem:[%s10 + $0x18] sm:$0xf]
      %v1281 = vld [vmem:[%s10 + $0x1c] sm:$0xf]
      %v1282 = vld [vmem:[%s10 + $0x20] sm:$0xf]
      %v1283 = vld [vmem:[%s10 + $0x24] sm:$0xf]
      %v1284 = vld [vmem:[%s10 + $0x28] sm:$0xf]
      %v1285 = vld [vmem:[%s10 + $0x2c] sm:$0xf]
      %v1286 = vld [vmem:[%s10 + $0x30] sm:$0xf]
      %v1287 = vld [vmem:[%s10 + $0x34] sm:$0xf]
      %v1288 = vld [vmem:[%s10 + $0x38] sm:$0xf]
      %v1289 = vld [vmem:[%s10 + $0x3c] sm:$0xf]
      %v1290 = vld [vmem:[%s11] sm:$0xff]
      %v1291 = vld [vmem:[%s11 + $0x8] sm:$0xff]
      %v1292 = vld [vmem:[%s11 + $0x10] sm:$0xff]
      %v1293 = vld [vmem:[%s11 + $0x18] sm:$0xff]
      %v1294 = vld [vmem:[%s11 + $0x20] sm:$0xff]
      %v1295 = vld [vmem:[%s11 + $0x28] sm:$0xff]
      %v1296 = vld [vmem:[%s11 + $0x30] sm:$0xff]
      %v1297 = vld [vmem:[%s11 + $0x38] sm:$0xff]
      %v1298 = vld [vmem:[%s11 + $0x40] sm:$0xff]
      %v1299 = vld [vmem:[%s11 + $0x48] sm:$0xff]
      %v1300 = vld [vmem:[%s11 + $0x50] sm:$0xff]
      %v1301 = vld [vmem:[%s11 + $0x58] sm:$0xff]
      %v1302 = vld [vmem:[%s11 + $0x60] sm:$0xff]
      %v1303 = vld [vmem:[%s11 + $0x68] sm:$0xff]
      %v1304 = vld [vmem:[%s11 + $0x70] sm:$0xff]
      %v1305 = vld [vmem:[%s11 + $0x78] sm:$0xff]
      %1307 = vset.pattern.permute.xlu0 0
      %1308 = vperm.xlu0 %1307, %v1290
      %v1309 = vpop.permute.xlu0 %1308
      %1312 = vset.pattern.permute.xlu0 0
      %1313 = vperm.xlu0 %1312, %v1291
      %v1314 = vpop.permute.xlu0 %1313
      %1317 = vset.pattern.permute.xlu0 0
      %1318 = vperm.xlu0 %1317, %v1292
      %v1319 = vpop.permute.xlu0 %1318
      %1322 = vset.pattern.permute.xlu0 0
      %1323 = vperm.xlu0 %1322, %v1293
      %v1324 = vpop.permute.xlu0 %1323
      %1327 = vset.pattern.permute.xlu0 0
      %1328 = vperm.xlu0 %1327, %v1294
      %v1329 = vpop.permute.xlu0 %1328
      %1332 = vset.pattern.permute.xlu0 0
      %1333 = vperm.xlu0 %1332, %v1295
      %v1334 = vpop.permute.xlu0 %1333
      %1337 = vset.pattern.permute.xlu0 0
      %1338 = vperm.xlu0 %1337, %v1296
      %v1339 = vpop.permute.xlu0 %1338
      %1342 = vset.pattern.permute.xlu0 0
      %1343 = vperm.xlu0 %1342, %v1297
      %v1344 = vpop.permute.xlu0 %1343
      %1347 = vset.pattern.permute.xlu0 0
      %1348 = vperm.xlu0 %1347, %v1298
      %v1349 = vpop.permute.xlu0 %1348
      %1352 = vset.pattern.permute.xlu0 0
      %1353 = vperm.xlu0 %1352, %v1299
      %v1354 = vpop.permute.xlu0 %1353
      %1357 = vset.pattern.permute.xlu0 0
      %1358 = vperm.xlu0 %1357, %v1300
      %v1359 = vpop.permute.xlu0 %1358
      %1362 = vset.pattern.permute.xlu0 0
      %1363 = vperm.xlu0 %1362, %v1301
      %v1364 = vpop.permute.xlu0 %1363
      %1367 = vset.pattern.permute.xlu0 0
      %1368 = vperm.xlu0 %1367, %v1302
      %v1369 = vpop.permute.xlu0 %1368
      %1372 = vset.pattern.permute.xlu0 0
      %1373 = vperm.xlu0 %1372, %v1303
      %v1374 = vpop.permute.xlu0 %1373
      %1377 = vset.pattern.permute.xlu0 0
      %1378 = vperm.xlu0 %1377, %v1304
      %v1379 = vpop.permute.xlu0 %1378
      %1382 = vset.pattern.permute.xlu0 0
      %1383 = vperm.xlu0 %1382, %v1305
      %v1384 = vpop.permute.xlu0 %1383
      %v1402 = vunpack.c.l.b16 %v1274
      %v1403 = vunpack.c.l.b16 %v1275
      %v1404 = vunpack.c.l.b16 %v1276
      %v1405 = vunpack.c.l.b16 %v1277
      %v1406 = vunpack.c.l.b16 %v1278
      %v1407 = vunpack.c.l.b16 %v1279
      %v1408 = vunpack.c.l.b16 %v1280
      %v1409 = vunpack.c.l.b16 %v1281
      %v1410 = vunpack.c.l.b16 %v1282
      %v1411 = vunpack.c.l.b16 %v1283
      %v1412 = vunpack.c.l.b16 %v1284
      %v1413 = vunpack.c.l.b16 %v1285
      %v1414 = vunpack.c.l.b16 %v1286
      %v1415 = vunpack.c.l.b16 %v1287
      %v1416 = vunpack.c.l.b16 %v1288
      %v1417 = vunpack.c.l.b16 %v1289
      %v1418 = vpack.c.b16 %v1403, %v1402
      %v1419 = vpack.c.b16 %v1405, %v1404
      %v1420 = vpack.c.b16 %v1407, %v1406
      %v1421 = vpack.c.b16 %v1409, %v1408
      %v1422 = vpack.c.b16 %v1411, %v1410
      %v1423 = vpack.c.b16 %v1413, %v1412
      %v1424 = vpack.c.b16 %v1415, %v1414
      %v1425 = vpack.c.b16 %v1417, %v1416
      %v1427 = vsel %vm797, %v1418, 0
      %v1430 = vsel %vm797, %v1419, 0
      %v1433 = vsel %vm797, %v1420, 0
      %v1436 = vsel %vm797, %v1421, 0
      %v1439 = vsel %vm797, %v1422, 0
      %v1442 = vsel %vm797, %v1423, 0
      %v1445 = vsel %vm797, %v1424, 0
      %v1448 = vsel %vm797, %v1425, 0
      %1450 = vmatprep.subr.bf16.mxu0 %v1271
      %1451 = vmatpush1.bf16.msra.mxu0 %v1270
      %1452 = vmatprep.subr.bf16.mxu0 %v1273
      %1453 = vmatpush1.bf16.msra.mxu0 %v1272
      %1454 = vmatprep.subr.bf16.mxu0 0
      %1455 = vmatpush1.bf16.msra.mxu0 0
      %1456 = vmatprep.subr.bf16.mxu0 0
      %1457 = vmatpush1.bf16.msra.mxu0 0
      %1458 = vmatprep.subr.bf16.mxu0 0
      %1459 = vmatpush1.bf16.msra.mxu0 0
      %1460 = vmatprep.subr.bf16.mxu0 0
      %1461 = vmatpush1.bf16.msra.mxu0 0
      %1462 = vmatprep.subr.bf16.mxu0 0
      %1463 = vmatpush1.bf16.msra.mxu0 0
      %1464 = vmatprep.subr.bf16.mxu0 0
      %1465 = vmatpush1.bf16.msra.mxu0 0
      %1466 = vmatprep.subr.bf16.mxu0 0
      %1467 = vmatpush1.bf16.msra.mxu0 0
      %1468 = vmatprep.subr.bf16.mxu0 0
      %1469 = vmatpush1.bf16.msra.mxu0 0
      %1470 = vmatprep.subr.bf16.mxu0 0
      %1471 = vmatpush1.bf16.msra.mxu0 0
      %1472 = vmatprep.subr.bf16.mxu0 0
      %1473 = vmatpush1.bf16.msra.mxu0 0
      %1474 = vmatprep.subr.bf16.mxu0 0
      %1475 = vmatpush1.bf16.msra.mxu0 0
      %1476 = vmatprep.subr.bf16.mxu0 0
      %1477 = vmatpush1.bf16.msra.mxu0 0
      %1478 = vmatprep.subr.bf16.mxu0 0
      %1479 = vmatpush1.bf16.msra.mxu0 0
      %1480 = vmatprep.subr.bf16.mxu0 0
      %1481 = vmatpush1.bf16.msra.mxu0 0
      %1482 = vmatprep.mubr.bf16.mxu0 0
      %1483 = vmatmul.mubr.bf16.gmra.mrb[0].mxu0 %v1427
      %v1484 = vpop.f32.mrb[0].mxu0
      %v1485 = vadd.f32 %v1309, %v1484
      %v1486 = vpop.f32.mrb[0].mxu0
      %v1487 = vadd.f32 %v1309, %v1486
      %v1488 = vpop.f32.mrb[0].mxu0
      %v1489 = vadd.f32 %v1314, %v1488
      %v1490 = vpop.f32.mrb[0].mxu0
      %v1491 = vadd.f32 %v1314, %v1490
      %1492 = vmatprep.mubr.bf16.mxu0 0
      %1493 = vmatmul.mubr.bf16.gmra.mrb[0].mxu0 %v1430
      %v1494 = vpop.f32.mrb[0].mxu0
      %v1495 = vadd.f32 %v1319, %v1494
      %v1496 = vpop.f32.mrb[0].mxu0
      %v1497 = vadd.f32 %v1319, %v1496
      %v1498 = vpop.f32.mrb[0].mxu0
      %v1499 = vadd.f32 %v1324, %v1498
      %v1500 = vpop.f32.mrb[0].mxu0
      %v1501 = vadd.f32 %v1324, %v1500
      %1502 = vmatprep.mubr.bf16.mxu0 0
      %1503 = vmatmul.mubr.bf16.gmra.mrb[0].mxu0 %v1433
      %v1504 = vpop.f32.mrb[0].mxu0
      %v1505 = vadd.f32 %v1329, %v1504
      %v1506 = vpop.f32.mrb[0].mxu0
      %v1507 = vadd.f32 %v1329, %v1506
      %v1508 = vpop.f32.mrb[0].mxu0
      %v1509 = vadd.f32 %v1334, %v1508
      %v1510 = vpop.f32.mrb[0].mxu0
      %v1511 = vadd.f32 %v1334, %v1510
      %1512 = vmatprep.mubr.bf16.mxu0 0
      %1513 = vmatmul.mubr.bf16.gmra.mrb[0].mxu0 %v1436
      %v1514 = vpop.f32.mrb[0].mxu0
      %v1515 = vadd.f32 %v1339, %v1514
      %v1516 = vpop.f32.mrb[0].mxu0
      %v1517 = vadd.f32 %v1339, %v1516
      %v1518 = vpop.f32.mrb[0].mxu0
      %v1519 = vadd.f32 %v1344, %v1518
      %v1520 = vpop.f32.mrb[0].mxu0
      %v1521 = vadd.f32 %v1344, %v1520
      %1522 = vmatprep.mubr.bf16.mxu0 0
      %1523 = vmatmul.mubr.bf16.gmra.mrb[0].mxu0 %v1439
      %v1524 = vpop.f32.mrb[0].mxu0
      %v1525 = vadd.f32 %v1349, %v1524
      %v1526 = vpop.f32.mrb[0].mxu0
      %v1527 = vadd.f32 %v1349, %v1526
      %v1528 = vpop.f32.mrb[0].mxu0
      %v1529 = vadd.f32 %v1354, %v1528
      %v1530 = vpop.f32.mrb[0].mxu0
      %v1531 = vadd.f32 %v1354, %v1530
      %1532 = vmatprep.mubr.bf16.mxu0 0
      %1533 = vmatmul.mubr.bf16.gmra.mrb[0].mxu0 %v1442
      %v1534 = vpop.f32.mrb[0].mxu0
      %v1535 = vadd.f32 %v1359, %v1534
      %v1536 = vpop.f32.mrb[0].mxu0
      %v1537 = vadd.f32 %v1359, %v1536
      %v1538 = vpop.f32.mrb[0].mxu0
      %v1539 = vadd.f32 %v1364, %v1538
      %v1540 = vpop.f32.mrb[0].mxu0
      %v1541 = vadd.f32 %v1364, %v1540
      %1542 = vmatprep.mubr.bf16.mxu0 0
      %1543 = vmatmul.mubr.bf16.gmra.mrb[0].mxu0 %v1445
      %v1544 = vpop.f32.mrb[0].mxu0
      %v1545 = vadd.f32 %v1369, %v1544
      %v1546 = vpop.f32.mrb[0].mxu0
      %v1547 = vadd.f32 %v1369, %v1546
      %v1548 = vpop.f32.mrb[0].mxu0
      %v1549 = vadd.f32 %v1374, %v1548
      %v1550 = vpop.f32.mrb[0].mxu0
      %v1551 = vadd.f32 %v1374, %v1550
      %1552 = vmatprep.mubr.bf16.mxu0 0
      %1553 = vmatmul.mubr.bf16.gmra.mrb[0].mxu0 %v1448
      %v1554 = vpop.f32.mrb[0].mxu0
      %v1555 = vadd.f32 %v1379, %v1554
      %v1556 = vpop.f32.mrb[0].mxu0
      %v1557 = vadd.f32 %v1379, %v1556
      %v1558 = vpop.f32.mrb[0].mxu0
      %v1559 = vadd.f32 %v1384, %v1558
      %v1560 = vpop.f32.mrb[0].mxu0
      %v1561 = vadd.f32 %v1384, %v1560
      %1562 = vdwg.mxu0
      %v1563 = vld [vmem:[%s12] sm:$0xf]
      %v1564 = vld [vmem:[%s12 + $0x4] sm:$0xf]
      %v1565 = vld [vmem:[%s12 + $0x8] sm:$0xf]
      %v1566 = vld [vmem:[%s12 + $0xc] sm:$0xf]
      %v1567 = vld [vmem:[%s12 + $0x10] sm:$0xf]
      %v1568 = vld [vmem:[%s12 + $0x14] sm:$0xf]
      %v1569 = vld [vmem:[%s12 + $0x18] sm:$0xf]
      %v1570 = vld [vmem:[%s12 + $0x1c] sm:$0xf]
      %v1571 = vld [vmem:[%s12 + $0x20] sm:$0xf]
      %v1572 = vld [vmem:[%s12 + $0x24] sm:$0xf]
      %v1573 = vld [vmem:[%s12 + $0x28] sm:$0xf]
      %v1574 = vld [vmem:[%s12 + $0x2c] sm:$0xf]
      %v1575 = vld [vmem:[%s12 + $0x30] sm:$0xf]
      %v1576 = vld [vmem:[%s12 + $0x34] sm:$0xf]
      %v1577 = vld [vmem:[%s12 + $0x38] sm:$0xf]
      %v1578 = vld [vmem:[%s12 + $0x3c] sm:$0xf]
      %v1579 = vld [vmem:[%s13] sm:$0xff]
      %v1580 = vld [vmem:[%s13 + $0x8] sm:$0xff]
      %v1581 = vld [vmem:[%s13 + $0x10] sm:$0xff]
      %v1582 = vld [vmem:[%s13 + $0x18] sm:$0xff]
      %v1583 = vld [vmem:[%s13 + $0x20] sm:$0xff]
      %v1584 = vld [vmem:[%s13 + $0x28] sm:$0xff]
      %v1585 = vld [vmem:[%s13 + $0x30] sm:$0xff]
      %v1586 = vld [vmem:[%s13 + $0x38] sm:$0xff]
      %v1587 = vld [vmem:[%s13 + $0x40] sm:$0xff]
      %v1588 = vld [vmem:[%s13 + $0x48] sm:$0xff]
      %v1589 = vld [vmem:[%s13 + $0x50] sm:$0xff]
      %v1590 = vld [vmem:[%s13 + $0x58] sm:$0xff]
      %v1591 = vld [vmem:[%s13 + $0x60] sm:$0xff]
      %v1592 = vld [vmem:[%s13 + $0x68] sm:$0xff]
      %v1593 = vld [vmem:[%s13 + $0x70] sm:$0xff]
      %v1594 = vld [vmem:[%s13 + $0x78] sm:$0xff]
      %1596 = vset.pattern.permute.xlu0 0
      %1597 = vperm.xlu0 %1596, %v1579
      %v1598 = vpop.permute.xlu0 %1597
      %1601 = vset.pattern.permute.xlu0 0
      %1602 = vperm.xlu0 %1601, %v1580
      %v1603 = vpop.permute.xlu0 %1602
      %1606 = vset.pattern.permute.xlu0 0
      %1607 = vperm.xlu0 %1606, %v1581
      %v1608 = vpop.permute.xlu0 %1607
      %1611 = vset.pattern.permute.xlu0 0
      %1612 = vperm.xlu0 %1611, %v1582
      %v1613 = vpop.permute.xlu0 %1612
      %1616 = vset.pattern.permute.xlu0 0
      %1617 = vperm.xlu0 %1616, %v1583
      %v1618 = vpop.permute.xlu0 %1617
      %1621 = vset.pattern.permute.xlu0 0
      %1622 = vperm.xlu0 %1621, %v1584
      %v1623 = vpop.permute.xlu0 %1622
      %1626 = vset.pattern.permute.xlu0 0
      %1627 = vperm.xlu0 %1626, %v1585
      %v1628 = vpop.permute.xlu0 %1627
      %1631 = vset.pattern.permute.xlu0 0
      %1632 = vperm.xlu0 %1631, %v1586
      %v1633 = vpop.permute.xlu0 %1632
      %1636 = vset.pattern.permute.xlu0 0
      %1637 = vperm.xlu0 %1636, %v1587
      %v1638 = vpop.permute.xlu0 %1637
      %1641 = vset.pattern.permute.xlu0 0
      %1642 = vperm.xlu0 %1641, %v1588
      %v1643 = vpop.permute.xlu0 %1642
      %1646 = vset.pattern.permute.xlu0 0
      %1647 = vperm.xlu0 %1646, %v1589
      %v1648 = vpop.permute.xlu0 %1647
      %1651 = vset.pattern.permute.xlu0 0
      %1652 = vperm.xlu0 %1651, %v1590
      %v1653 = vpop.permute.xlu0 %1652
      %1656 = vset.pattern.permute.xlu0 0
      %1657 = vperm.xlu0 %1656, %v1591
      %v1658 = vpop.permute.xlu0 %1657
      %1661 = vset.pattern.permute.xlu0 0
      %1662 = vperm.xlu0 %1661, %v1592
      %v1663 = vpop.permute.xlu0 %1662
      %1666 = vset.pattern.permute.xlu0 0
      %1667 = vperm.xlu0 %1666, %v1593
      %v1668 = vpop.permute.xlu0 %1667
      %1671 = vset.pattern.permute.xlu0 0
      %1672 = vperm.xlu0 %1671, %v1594
      %v1673 = vpop.permute.xlu0 %1672
      %v1691 = vunpack.c.l.b16 %v1563
      %v1692 = vunpack.c.l.b16 %v1564
      %v1693 = vunpack.c.l.b16 %v1565
      %v1694 = vunpack.c.l.b16 %v1566
      %v1695 = vunpack.c.l.b16 %v1567
      %v1696 = vunpack.c.l.b16 %v1568
      %v1697 = vunpack.c.l.b16 %v1569
      %v1698 = vunpack.c.l.b16 %v1570
      %v1699 = vunpack.c.l.b16 %v1571
      %v1700 = vunpack.c.l.b16 %v1572
      %v1701 = vunpack.c.l.b16 %v1573
      %v1702 = vunpack.c.l.b16 %v1574
      %v1703 = vunpack.c.l.b16 %v1575
      %v1704 = vunpack.c.l.b16 %v1576
      %v1705 = vunpack.c.l.b16 %v1577
      %v1706 = vunpack.c.l.b16 %v1578
      %v1707 = vpack.c.b16 %v1692, %v1691
      %v1708 = vpack.c.b16 %v1694, %v1693
      %v1709 = vpack.c.b16 %v1696, %v1695
      %v1710 = vpack.c.b16 %v1698, %v1697
      %v1711 = vpack.c.b16 %v1700, %v1699
      %v1712 = vpack.c.b16 %v1702, %v1701
      %v1713 = vpack.c.b16 %v1704, %v1703
      %v1714 = vpack.c.b16 %v1706, %v1705
      %v1716 = vsel %vm797, %v1707, 0
      %v1719 = vsel %vm797, %v1708, 0
      %v1722 = vsel %vm797, %v1709, 0
      %v1725 = vsel %vm797, %v1710, 0
      %v1728 = vsel %vm797, %v1711, 0
      %v1731 = vsel %vm797, %v1712, 0
      %v1734 = vsel %vm797, %v1713, 0
      %v1737 = vsel %vm797, %v1714, 0
      %1739 = vmatprep.subr.bf16.mxu0 %v1271
      %1740 = vmatpush1.bf16.msra.mxu0 %v1270
      %1741 = vmatprep.subr.bf16.mxu0 %v1273
      %1742 = vmatpush1.bf16.msra.mxu0 %v1272
      %1743 = vmatprep.subr.bf16.mxu0 0
      %1744 = vmatpush1.bf16.msra.mxu0 0
      %1745 = vmatprep.subr.bf16.mxu0 0
      %1746 = vmatpush1.bf16.msra.mxu0 0
      %1747 = vmatprep.subr.bf16.mxu0 0
      %1748 = vmatpush1.bf16.msra.mxu0 0
      %1749 = vmatprep.subr.bf16.mxu0 0
      %1750 = vmatpush1.bf16.msra.mxu0 0
      %1751 = vmatprep.subr.bf16.mxu0 0
      %1752 = vmatpush1.bf16.msra.mxu0 0
      %1753 = vmatprep.subr.bf16.mxu0 0
      %1754 = vmatpush1.bf16.msra.mxu0 0
      %1755 = vmatprep.subr.bf16.mxu0 0
      %1756 = vmatpush1.bf16.msra.mxu0 0
      %1757 = vmatprep.subr.bf16.mxu0 0
      %1758 = vmatpush1.bf16.msra.mxu0 0
      %1759 = vmatprep.subr.bf16.mxu0 0
      %1760 = vmatpush1.bf16.msra.mxu0 0
      %1761 = vmatprep.subr.bf16.mxu0 0
      %1762 = vmatpush1.bf16.msra.mxu0 0
      %1763 = vmatprep.subr.bf16.mxu0 0
      %1764 = vmatpush1.bf16.msra.mxu0 0
      %1765 = vmatprep.subr.bf16.mxu0 0
      %1766 = vmatpush1.bf16.msra.mxu0 0
      %1767 = vmatprep.subr.bf16.mxu0 0
      %1768 = vmatpush1.bf16.msra.mxu0 0
      %1769 = vmatprep.subr.bf16.mxu0 0
      %1770 = vmatpush1.bf16.msra.mxu0 0
      %1771 = vmatprep.mubr.bf16.mxu0 0
      %1772 = vmatmul.mubr.bf16.gmra.mrb[0].mxu0 %v1716
      %v1773 = vpop.f32.mrb[0].mxu0
      %v1774 = vadd.f32 %v1598, %v1773
      %v1775 = vpop.f32.mrb[0].mxu0
      %v1776 = vadd.f32 %v1598, %v1775
      %v1777 = vpop.f32.mrb[0].mxu0
      %v1778 = vadd.f32 %v1603, %v1777
      %v1779 = vpop.f32.mrb[0].mxu0
      %v1780 = vadd.f32 %v1603, %v1779
      %1781 = vmatprep.mubr.bf16.mxu0 0
      %1782 = vmatmul.mubr.bf16.gmra.mrb[0].mxu0 %v1719
      %v1783 = vpop.f32.mrb[0].mxu0
      %v1784 = vadd.f32 %v1608, %v1783
      %v1785 = vpop.f32.mrb[0].mxu0
      %v1786 = vadd.f32 %v1608, %v1785
      %v1787 = vpop.f32.mrb[0].mxu0
      %v1788 = vadd.f32 %v1613, %v1787
      %v1789 = vpop.f32.mrb[0].mxu0
      %v1790 = vadd.f32 %v1613, %v1789
      %1791 = vmatprep.mubr.bf16.mxu0 0
      %1792 = vmatmul.mubr.bf16.gmra.mrb[0].mxu0 %v1722
      %v1793 = vpop.f32.mrb[0].mxu0
      %v1794 = vadd.f32 %v1618, %v1793
      %v1795 = vpop.f32.mrb[0].mxu0
      %v1796 = vadd.f32 %v1618, %v1795
      %v1797 = vpop.f32.mrb[0].mxu0
      %v1798 = vadd.f32 %v1623, %v1797
      %v1799 = vpop.f32.mrb[0].mxu0
      %v1800 = vadd.f32 %v1623, %v1799
      %1801 = vmatprep.mubr.bf16.mxu0 0
      %1802 = vmatmul.mubr.bf16.gmra.mrb[0].mxu0 %v1725
      %v1803 = vpop.f32.mrb[0].mxu0
      %v1804 = vadd.f32 %v1628, %v1803
      %v1805 = vpop.f32.mrb[0].mxu0
      %v1806 = vadd.f32 %v1628, %v1805
      %v1807 = vpop.f32.mrb[0].mxu0
      %v1808 = vadd.f32 %v1633, %v1807
      %v1809 = vpop.f32.mrb[0].mxu0
      %v1810 = vadd.f32 %v1633, %v1809
      %1811 = vmatprep.mubr.bf16.mxu0 0
      %1812 = vmatmul.mubr.bf16.gmra.mrb[0].mxu0 %v1728
      %v1813 = vpop.f32.mrb[0].mxu0
      %v1814 = vadd.f32 %v1638, %v1813
      %v1815 = vpop.f32.mrb[0].mxu0
      %v1816 = vadd.f32 %v1638, %v1815
      %v1817 = vpop.f32.mrb[0].mxu0
      %v1818 = vadd.f32 %v1643, %v1817
      %v1819 = vpop.f32.mrb[0].mxu0
      %v1820 = vadd.f32 %v1643, %v1819
      %1821 = vmatprep.mubr.bf16.mxu0 0
      %1822 = vmatmul.mubr.bf16.gmra.mrb[0].mxu0 %v1731
      %v1823 = vpop.f32.mrb[0].mxu0
      %v1824 = vadd.f32 %v1648, %v1823
      %v1825 = vpop.f32.mrb[0].mxu0
      %v1826 = vadd.f32 %v1648, %v1825
      %v1827 = vpop.f32.mrb[0].mxu0
      %v1828 = vadd.f32 %v1653, %v1827
      %v1829 = vpop.f32.mrb[0].mxu0
      %v1830 = vadd.f32 %v1653, %v1829
      %1831 = vmatprep.mubr.bf16.mxu0 0
      %1832 = vmatmul.mubr.bf16.gmra.mrb[0].mxu0 %v1734
      %v1833 = vpop.f32.mrb[0].mxu0
      %v1834 = vadd.f32 %v1658, %v1833
      %v1835 = vpop.f32.mrb[0].mxu0
      %v1836 = vadd.f32 %v1658, %v1835
      %v1837 = vpop.f32.mrb[0].mxu0
      %v1838 = vadd.f32 %v1663, %v1837
      %v1839 = vpop.f32.mrb[0].mxu0
      %v1840 = vadd.f32 %v1663, %v1839
      %1841 = vmatprep.mubr.bf16.mxu0 0
      %1842 = vmatmul.mubr.bf16.gmra.mrb[0].mxu0 %v1737
      %v1843 = vpop.f32.mrb[0].mxu0
      %v1844 = vadd.f32 %v1668, %v1843
      %v1845 = vpop.f32.mrb[0].mxu0
      %v1846 = vadd.f32 %v1668, %v1845
      %v1847 = vpop.f32.mrb[0].mxu0
      %v1848 = vadd.f32 %v1673, %v1847
      %v1849 = vpop.f32.mrb[0].mxu0
      %v1850 = vadd.f32 %v1673, %v1849
      %1851 = vdwg.mxu0
      %v1852 = vmul.f32 %v1774, 0.5
      %v1853 = vmul.f32 %v1776, 0.5
      %v1854 = vmul.f32 %v1778, 0.5
      %v1855 = vmul.f32 %v1780, 0.5
      %v1856 = vmul.f32 %v1784, 0.5
      %v1857 = vmul.f32 %v1786, 0.5
      %v1858 = vmul.f32 %v1788, 0.5
      %v1859 = vmul.f32 %v1790, 0.5
      %v1860 = vmul.f32 %v1794, 0.5
      %v1861 = vmul.f32 %v1796, 0.5
      %v1862 = vmul.f32 %v1798, 0.5
      %v1863 = vmul.f32 %v1800, 0.5
      %v1864 = vmul.f32 %v1804, 0.5
      %v1865 = vmul.f32 %v1806, 0.5
      %v1866 = vmul.f32 %v1808, 0.5
      %v1867 = vmul.f32 %v1810, 0.5
      %v1868 = vmul.f32 %v1814, 0.5
      %v1869 = vmul.f32 %v1816, 0.5
      %v1870 = vmul.f32 %v1818, 0.5
      %v1871 = vmul.f32 %v1820, 0.5
      %v1872 = vmul.f32 %v1824, 0.5
      %v1873 = vmul.f32 %v1826, 0.5
      %v1874 = vmul.f32 %v1828, 0.5
      %v1875 = vmul.f32 %v1830, 0.5
      %v1876 = vmul.f32 %v1834, 0.5
      %v1877 = vmul.f32 %v1836, 0.5
      %v1878 = vmul.f32 %v1838, 0.5
      %v1879 = vmul.f32 %v1840, 0.5
      %v1880 = vmul.f32 %v1844, 0.5
      %v1881 = vmul.f32 %v1846, 0.5
      %v1882 = vmul.f32 %v1848, 0.5
      %v1883 = vmul.f32 %v1850, 0.5
      %v1884 = vmul.f32 %v1774, 0.70710677
      %v1885 = vmul.f32 %v1776, 0.70710677
      %v1886 = vmul.f32 %v1778, 0.70710677
      %v1887 = vmul.f32 %v1780, 0.70710677
      %v1888 = vmul.f32 %v1784, 0.70710677
      %v1889 = vmul.f32 %v1786, 0.70710677
      %v1890 = vmul.f32 %v1788, 0.70710677
      %v1891 = vmul.f32 %v1790, 0.70710677
      %v1892 = vmul.f32 %v1794, 0.70710677
      %v1893 = vmul.f32 %v1796, 0.70710677
      %v1894 = vmul.f32 %v1798, 0.70710677
      %v1895 = vmul.f32 %v1800, 0.70710677
      %v1896 = vmul.f32 %v1804, 0.70710677
      %v1897 = vmul.f32 %v1806, 0.70710677
      %v1898 = vmul.f32 %v1808, 0.70710677
      %v1899 = vmul.f32 %v1810, 0.70710677
      %v1900 = vmul.f32 %v1814, 0.70710677
      %v1901 = vmul.f32 %v1816, 0.70710677
      %v1902 = vmul.f32 %v1818, 0.70710677
      %v1903 = vmul.f32 %v1820, 0.70710677
      %v1904 = vmul.f32 %v1824, 0.70710677
      %v1905 = vmul.f32 %v1826, 0.70710677
      %v1906 = vmul.f32 %v1828, 0.70710677
      %v1907 = vmul.f32 %v1830, 0.70710677
      %v1908 = vmul.f32 %v1834, 0.70710677
      %v1909 = vmul.f32 %v1836, 0.70710677
      %v1910 = vmul.f32 %v1838, 0.70710677
      %v1911 = vmul.f32 %v1840, 0.70710677
      %v1912 = vmul.f32 %v1844, 0.70710677
      %v1913 = vmul.f32 %v1846, 0.70710677
      %v1914 = vmul.f32 %v1848, 0.70710677
      %v1915 = vmul.f32 %v1850, 0.70710677
      %v1916 = verf.f32.pop %v1884
      %v1917 = verf.f32.pop %v1885
      %v1918 = verf.f32.pop %v1886
      %v1919 = verf.f32.pop %v1887
      %v1920 = verf.f32.pop %v1888
      %v1921 = verf.f32.pop %v1889
      %v1922 = verf.f32.pop %v1890
      %v1923 = verf.f32.pop %v1891
      %v1924 = verf.f32.pop %v1892
      %v1925 = verf.f32.pop %v1893
      %v1926 = verf.f32.pop %v1894
      %v1927 = verf.f32.pop %v1895
      %v1928 = verf.f32.pop %v1896
      %v1929 = verf.f32.pop %v1897
      %v1930 = verf.f32.pop %v1898
      %v1931 = verf.f32.pop %v1899
      %v1932 = verf.f32.pop %v1900
      %v1933 = verf.f32.pop %v1901
      %v1934 = verf.f32.pop %v1902
      %v1935 = verf.f32.pop %v1903
      %v1936 = verf.f32.pop %v1904
      %v1937 = verf.f32.pop %v1905
      %v1938 = verf.f32.pop %v1906
      %v1939 = verf.f32.pop %v1907
      %v1940 = verf.f32.pop %v1908
      %v1941 = verf.f32.pop %v1909
      %v1942 = verf.f32.pop %v1910
      %v1943 = verf.f32.pop %v1911
      %v1944 = verf.f32.pop %v1912
      %v1945 = verf.f32.pop %v1913
      %v1946 = verf.f32.pop %v1914
      %v1947 = verf.f32.pop %v1915
      %v1948 = vadd.f32 %v1916, 1.0
      %v1949 = vadd.f32 %v1917, 1.0
      %v1950 = vadd.f32 %v1918, 1.0
      %v1951 = vadd.f32 %v1919, 1.0
      %v1952 = vadd.f32 %v1920, 1.0
      %v1953 = vadd.f32 %v1921, 1.0
      %v1954 = vadd.f32 %v1922, 1.0
      %v1955 = vadd.f32 %v1923, 1.0
      %v1956 = vadd.f32 %v1924, 1.0
      %v1957 = vadd.f32 %v1925, 1.0
      %v1958 = vadd.f32 %v1926, 1.0
      %v1959 = vadd.f32 %v1927, 1.0
      %v1960 = vadd.f32 %v1928, 1.0
      %v1961 = vadd.f32 %v1929, 1.0
      %v1962 = vadd.f32 %v1930, 1.0
      %v1963 = vadd.f32 %v1931, 1.0
      %v1964 = vadd.f32 %v1932, 1.0
      %v1965 = vadd.f32 %v1933, 1.0
      %v1966 = vadd.f32 %v1934, 1.0
      %v1967 = vadd.f32 %v1935, 1.0
      %v1968 = vadd.f32 %v1936, 1.0
      %v1969 = vadd.f32 %v1937, 1.0
      %v1970 = vadd.f32 %v1938, 1.0
      %v1971 = vadd.f32 %v1939, 1.0
      %v1972 = vadd.f32 %v1940, 1.0
      %v1973 = vadd.f32 %v1941, 1.0
      %v1974 = vadd.f32 %v1942, 1.0
      %v1975 = vadd.f32 %v1943, 1.0
      %v1976 = vadd.f32 %v1944, 1.0
      %v1977 = vadd.f32 %v1945, 1.0
      %v1978 = vadd.f32 %v1946, 1.0
      %v1979 = vadd.f32 %v1947, 1.0
      %v1980 = vmul.f32 %v1852, %v1948
      %v1981 = vmul.f32 %v1853, %v1949
      %v1982 = vmul.f32 %v1854, %v1950
      %v1983 = vmul.f32 %v1855, %v1951
      %v1984 = vmul.f32 %v1856, %v1952
      %v1985 = vmul.f32 %v1857, %v1953
      %v1986 = vmul.f32 %v1858, %v1954
      %v1987 = vmul.f32 %v1859, %v1955
      %v1988 = vmul.f32 %v1860, %v1956
      %v1989 = vmul.f32 %v1861, %v1957
      %v1990 = vmul.f32 %v1862, %v1958
      %v1991 = vmul.f32 %v1863, %v1959
      %v1992 = vmul.f32 %v1864, %v1960
      %v1993 = vmul.f32 %v1865, %v1961
      %v1994 = vmul.f32 %v1866, %v1962
      %v1995 = vmul.f32 %v1867, %v1963
      %v1996 = vmul.f32 %v1868, %v1964
      %v1997 = vmul.f32 %v1869, %v1965
      %v1998 = vmul.f32 %v1870, %v1966
      %v1999 = vmul.f32 %v1871, %v1967
      %v2000 = vmul.f32 %v1872, %v1968
      %v2001 = vmul.f32 %v1873, %v1969
      %v2002 = vmul.f32 %v1874, %v1970
      %v2003 = vmul.f32 %v1875, %v1971
      %v2004 = vmul.f32 %v1876, %v1972
      %v2005 = vmul.f32 %v1877, %v1973
      %v2006 = vmul.f32 %v1878, %v1974
      %v2007 = vmul.f32 %v1879, %v1975
      %v2008 = vmul.f32 %v1880, %v1976
      %v2009 = vmul.f32 %v1881, %v1977
      %v2010 = vmul.f32 %v1882, %v1978
      %v2011 = vmul.f32 %v1883, %v1979
      %v2012 = vld [vmem:[%s14] sm:$0xf]
      %v2013 = vld [vmem:[%s14 + $0x4] sm:$0xf]
      %v2014 = vld [vmem:[%s14 + $0x8] sm:$0xf]
      %v2015 = vld [vmem:[%s14 + $0xc] sm:$0xf]
      %v2016 = vmul.f32 %v1485, %v1980
      %v2017 = vmul.f32 %v1487, %v1981
      %v2018 = vmul.f32 %v1489, %v1982
      %v2019 = vmul.f32 %v1491, %v1983
      %v2020 = vmul.f32 %v1495, %v1984
      %v2021 = vmul.f32 %v1497, %v1985
      %v2022 = vmul.f32 %v1499, %v1986
      %v2023 = vmul.f32 %v1501, %v1987
      %v2024 = vmul.f32 %v1505, %v1988
      %v2025 = vmul.f32 %v1507, %v1989
      %v2026 = vmul.f32 %v1509, %v1990
      %v2027 = vmul.f32 %v1511, %v1991
      %v2028 = vmul.f32 %v1515, %v1992
      %v2029 = vmul.f32 %v1517, %v1993
      %v2030 = vmul.f32 %v1519, %v1994
      %v2031 = vmul.f32 %v1521, %v1995
      %v2032 = vmul.f32 %v1525, %v1996
      %v2033 = vmul.f32 %v1527, %v1997
      %v2034 = vmul.f32 %v1529, %v1998
      %v2035 = vmul.f32 %v1531, %v1999
      %v2036 = vmul.f32 %v1535, %v2000
      %v2037 = vmul.f32 %v1537, %v2001
      %v2038 = vmul.f32 %v1539, %v2002
      %v2039 = vmul.f32 %v1541, %v2003
      %v2040 = vmul.f32 %v1545, %v2004
      %v2041 = vmul.f32 %v1547, %v2005
      %v2042 = vmul.f32 %v1549, %v2006
      %v2043 = vmul.f32 %v1551, %v2007
      %v2044 = vmul.f32 %v1555, %v2008
      %v2045 = vmul.f32 %v1557, %v2009
      %v2046 = vmul.f32 %v1559, %v2010
      %v2047 = vmul.f32 %v1561, %v2011
      %v2048 = vpack.c.bf16 %v2018, %v2016
      %v2049 = vpack.c.bf16 %v2019, %v2017
      %v2050 = vpack.c.bf16 %v2022, %v2020
      %v2051 = vpack.c.bf16 %v2023, %v2021
      %v2052 = vpack.c.bf16 %v2026, %v2024
      %v2053 = vpack.c.bf16 %v2027, %v2025
      %v2054 = vpack.c.bf16 %v2030, %v2028
      %v2055 = vpack.c.bf16 %v2031, %v2029
      %v2056 = vpack.c.bf16 %v2034, %v2032
      %v2057 = vpack.c.bf16 %v2035, %v2033
      %v2058 = vpack.c.bf16 %v2038, %v2036
      %v2059 = vpack.c.bf16 %v2039, %v2037
      %v2060 = vpack.c.bf16 %v2042, %v2040
      %v2061 = vpack.c.bf16 %v2043, %v2041
      %v2062 = vpack.c.bf16 %v2046, %v2044
      %v2063 = vpack.c.bf16 %v2047, %v2045
      %v2064 = vld [vmem:[%s15] sm:$0xff]
      %v2065 = vld [vmem:[%s15 + $0x8] sm:$0xff]
      %v2066 = vld [vmem:[%s15 + $0x10] sm:$0xff]
      %v2067 = vld [vmem:[%s15 + $0x18] sm:$0xff]
      %2069 = vset.pattern.permute.xlu0 0
      %2070 = vperm.xlu0 %2069, %v2064
      %v2071 = vpop.permute.xlu0 %2070
      %2074 = vset.pattern.permute.xlu0 0
      %2075 = vperm.xlu0 %2074, %v2065
      %v2076 = vpop.permute.xlu0 %2075
      %2079 = vset.pattern.permute.xlu0 0
      %2080 = vperm.xlu0 %2079, %v2066
      %v2081 = vpop.permute.xlu0 %2080
      %2084 = vset.pattern.permute.xlu0 0
      %2085 = vperm.xlu0 %2084, %v2067
      %v2086 = vpop.permute.xlu0 %2085
      %v2092 = vunpack.c.l.b16 %v2012
      %v2093 = vunpack.c.l.b16 %v2013
      %v2094 = vunpack.c.l.b16 %v2014
      %v2095 = vunpack.c.l.b16 %v2015
      %v2096 = vpack.c.b16 %v2093, %v2092
      %v2097 = vpack.c.b16 %v2095, %v2094
      %2100 = vmatprep.subr.bf16.mxu0 %v2049
      %2101 = vmatpush1.bf16.msra.mxu0 %v2048
      %2102 = vmatprep.subr.bf16.mxu0 %v2051
      %2103 = vmatpush1.bf16.msra.mxu0 %v2050
      %2104 = vmatprep.subr.bf16.mxu0 %v2053
      %2105 = vmatpush1.bf16.msra.mxu0 %v2052
      %2106 = vmatprep.subr.bf16.mxu0 %v2055
      %2107 = vmatpush1.bf16.msra.mxu0 %v2054
      %2108 = vmatprep.subr.bf16.mxu0 %v2057
      %2109 = vmatpush1.bf16.msra.mxu0 %v2056
      %2110 = vmatprep.subr.bf16.mxu0 %v2059
      %2111 = vmatpush1.bf16.msra.mxu0 %v2058
      %2112 = vmatprep.subr.bf16.mxu0 %v2061
      %2113 = vmatpush1.bf16.msra.mxu0 %v2060
      %2114 = vmatprep.subr.bf16.mxu0 %v2063
      %2115 = vmatpush1.bf16.msra.mxu0 %v2062
      %2116 = vmatprep.subr.bf16.mxu0 0
      %2117 = vmatpush1.bf16.msra.mxu0 0
      %2118 = vmatprep.subr.bf16.mxu0 0
      %2119 = vmatpush1.bf16.msra.mxu0 0
      %2120 = vmatprep.subr.bf16.mxu0 0
      %2121 = vmatpush1.bf16.msra.mxu0 0
      %2122 = vmatprep.subr.bf16.mxu0 0
      %2123 = vmatpush1.bf16.msra.mxu0 0
      %2124 = vmatprep.subr.bf16.mxu0 0
      %2125 = vmatpush1.bf16.msra.mxu0 0
      %2126 = vmatprep.subr.bf16.mxu0 0
      %2127 = vmatpush1.bf16.msra.mxu0 0
      %2128 = vmatprep.subr.bf16.mxu0 0
      %2129 = vmatpush1.bf16.msra.mxu0 0
      %2130 = vmatprep.subr.bf16.mxu0 0
      %2131 = vmatpush1.bf16.msra.mxu0 0
      %2132 = vmatprep.mubr.bf16.mxu0 0
      %2133 = vmatmul.mubr.bf16.gmra.mrb[0].mxu0 %v2096
      %v2134 = vpop.f32.mrb[0].mxu0
      %v2135 = vadd.f32 %v2071, %v2134
      %v2136 = vpop.f32.mrb[0].mxu0
      %v2137 = vadd.f32 %v2071, %v2136
      %v2138 = vpop.f32.mrb[0].mxu0
      %v2139 = vadd.f32 %v2076, %v2138
      %v2140 = vpop.f32.mrb[0].mxu0
      %v2141 = vadd.f32 %v2076, %v2140
      %2142 = vmatprep.mubr.bf16.mxu0 0
      %2143 = vmatmul.mubr.bf16.gmra.mrb[0].mxu0 %v2097
      %v2144 = vpop.f32.mrb[0].mxu0
      %v2145 = vadd.f32 %v2081, %v2144
      %v2146 = vpop.f32.mrb[0].mxu0
      %v2147 = vadd.f32 %v2081, %v2146
      %v2148 = vpop.f32.mrb[0].mxu0
      %v2149 = vadd.f32 %v2086, %v2148
      %v2150 = vpop.f32.mrb[0].mxu0
      %v2151 = vadd.f32 %v2086, %v2150
      %2152 = vdwg.mxu0
      %v2153 = vadd.f32 %v2135, %v990
      %v2154 = vadd.f32 %v2137, %v991
      %v2155 = vadd.f32 %v2139, %v992
      %v2156 = vadd.f32 %v2141, %v993
      %v2157 = vadd.f32 %v2145, %v994
      %v2158 = vadd.f32 %v2147, %v995
      %v2159 = vadd.f32 %v2149, %v996
      %v2160 = vadd.f32 %v2151, %v997
      %v2161 = vld [vmem:[%s16] sm:$0xf]
      %v2162 = vld [vmem:[%s16 + $0x4] sm:$0xf]
      %v2163 = vld [vmem:[%s16 + $0x8] sm:$0xf]
      %v2164 = vld [vmem:[%s16 + $0xc] sm:$0xf]
      %v2165 = vpack.c.bf16 %v2155, %v2153
      %v2166 = vpack.c.bf16 %v2156, %v2154
      %v2167 = vpack.c.bf16 %v2159, %v2157
      %v2168 = vpack.c.bf16 %v2160, %v2158
      %v2169 = vld [vmem:[%s17] sm:$0xff]
      %v2170 = vld [vmem:[%s17 + $0x8] sm:$0xff]
      %v2171 = vld [vmem:[%s17 + $0x10] sm:$0xff]
      %v2172 = vld [vmem:[%s17 + $0x18] sm:$0xff]
      %2174 = vset.pattern.permute.xlu0 0
      %2175 = vperm.xlu0 %2174, %v2169
      %v2176 = vpop.permute.xlu0 %2175
      %2179 = vset.pattern.permute.xlu0 0
      %2180 = vperm.xlu0 %2179, %v2170
      %v2181 = vpop.permute.xlu0 %2180
      %2184 = vset.pattern.permute.xlu0 0
      %2185 = vperm.xlu0 %2184, %v2171
      %v2186 = vpop.permute.xlu0 %2185
      %2189 = vset.pattern.permute.xlu0 0
      %2190 = vperm.xlu0 %2189, %v2172
      %v2191 = vpop.permute.xlu0 %2190
      %v2197 = vunpack.c.l.b16 %v2161
      %v2198 = vunpack.c.l.b16 %v2162
      %v2199 = vunpack.c.l.b16 %v2163
      %v2200 = vunpack.c.l.b16 %v2164
      %v2201 = vpack.c.b16 %v2198, %v2197
      %v2202 = vpack.c.b16 %v2200, %v2199
      %v2204 = vsel %vm797, %v2201, 0
      %v2207 = vsel %vm797, %v2202, 0
      %2209 = vmatprep.subr.bf16.mxu0 %v2166
      %2210 = vmatpush1.bf16.msra.mxu0 %v2165
      %2211 = vmatprep.subr.bf16.mxu0 %v2168
      %2212 = vmatpush1.bf16.msra.mxu0 %v2167
      %2213 = vmatprep.subr.bf16.mxu0 0
      %2214 = vmatpush1.bf16.msra.mxu0 0
      %2215 = vmatprep.subr.bf16.mxu0 0
      %2216 = vmatpush1.bf16.msra.mxu0 0
      %2217 = vmatprep.subr.bf16.mxu0 0
      %2218 = vmatpush1.bf16.msra.mxu0 0
      %2219 = vmatprep.subr.bf16.mxu0 0
      %2220 = vmatpush1.bf16.msra.mxu0 0
      %2221 = vmatprep.subr.bf16.mxu0 0
      %2222 = vmatpush1.bf16.msra.mxu0 0
      %2223 = vmatprep.subr.bf16.mxu0 0
      %2224 = vmatpush1.bf16.msra.mxu0 0
      %2225 = vmatprep.subr.bf16.mxu0 0
      %2226 = vmatpush1.bf16.msra.mxu0 0
      %2227 = vmatprep.subr.bf16.mxu0 0
      %2228 = vmatpush1.bf16.msra.mxu0 0
      %2229 = vmatprep.subr.bf16.mxu0 0
      %2230 = vmatpush1.bf16.msra.mxu0 0
      %2231 = vmatprep.subr.bf16.mxu0 0
      %2232 = vmatpush1.bf16.msra.mxu0 0
      %2233 = vmatprep.subr.bf16.mxu0 0
      %2234 = vmatpush1.bf16.msra.mxu0 0
      %2235 = vmatprep.subr.bf16.mxu0 0
      %2236 = vmatpush1.bf16.msra.mxu0 0
      %2237 = vmatprep.subr.bf16.mxu0 0
      %2238 = vmatpush1.bf16.msra.mxu0 0
      %2239 = vmatprep.subr.bf16.mxu0 0
      %2240 = vmatpush1.bf16.msra.mxu0 0
      %2241 = vmatprep.mubr.bf16.mxu0 0
      %2242 = vmatmul.mubr.bf16.gmra.mrb[0].mxu0 %v2204
      %v2243 = vpop.f32.mrb[0].mxu0
      %v2244 = vadd.f32 %v2176, %v2243
      %v2245 = vpop.f32.mrb[0].mxu0
      %v2246 = vadd.f32 %v2176, %v2245
      %v2247 = vpop.f32.mrb[0].mxu0
      %v2248 = vadd.f32 %v2181, %v2247
      %v2249 = vpop.f32.mrb[0].mxu0
      %v2250 = vadd.f32 %v2181, %v2249
      %2251 = vmatprep.mubr.bf16.mxu0 0
      %2252 = vmatmul.mubr.bf16.gmra.mrb[0].mxu0 %v2207
      %v2253 = vpop.f32.mrb[0].mxu0
      %v2254 = vadd.f32 %v2186, %v2253
      %v2255 = vpop.f32.mrb[0].mxu0
      %v2256 = vadd.f32 %v2186, %v2255
      %v2257 = vpop.f32.mrb[0].mxu0
      %v2258 = vadd.f32 %v2191, %v2257
      %v2259 = vpop.f32.mrb[0].mxu0
      %v2260 = vadd.f32 %v2191, %v2259
      %2261 = vdwg.mxu0
      %v2262 = vadd.f32 %v2244, %v683
      %v2263 = vadd.f32 %v2246, %v684
      %v2264 = vadd.f32 %v2248, %v685
      %v2265 = vadd.f32 %v2250, %v686
      %v2266 = vadd.f32 %v2254, %v687
      %v2267 = vadd.f32 %v2256, %v688
      %v2268 = vadd.f32 %v2258, %v689
      %v2269 = vadd.f32 %v2260, %v690
      %2270 = vst [vmem:[%s680] sm:$0xff] %v2262
      %2271 = vst [vmem:[%s680 + $0x8] sm:$0xff] %v2263
      %2272 = vst [vmem:[%s680 + $0x10] sm:$0xff] %v2264
      %2273 = vst [vmem:[%s680 + $0x18] sm:$0xff] %v2265
      %2274 = vst [vmem:[%s680 + $0x20] sm:$0xff] %v2266
      %2275 = vst [vmem:[%s680 + $0x28] sm:$0xff] %v2267
      %2276 = vst [vmem:[%s680 + $0x30] sm:$0xff] %v2268
      %2277 = vst [vmem:[%s680 + $0x38] sm:$0xff] %v2269
      %s2278 = smul.u32 2, %s35
      %p2279 = scmp.lt.s32.totalorder %s34, 1
      %s2280 = scalar_select %p2279, %s34, 1
      %p2281 = scmp.lt.s32.totalorder %s2278, 1
      %s2282 = scalar_select %p2281, %s2278, 1
      %s2283 = smul.addr %s2280, 8
      %s2284 = sadd.s32 %s2282, %s2283
      %s2285 = smul.addr %s2284, 8
      %s2286 = scalar_lea.vmem %s19, %s2285
      // Predicated region
      $region97: #{unet_attention_block.1} parent=95 // pred_check
        %p2287 = pneg %p478
      $region98: #{unet_attention_block.1} parent=95 // pred_check_branch
        %2289 = sbr.rel (%p2287) target = $region100
      $region99: #{unet_attention_block.1} parent=95 // pred_region
        %s2290 = smul.u32 2, %s35
      $region100: #{unet_attention_block.1} parent=95 // pred_fallthru
        _
    $region96: #{unet_attention_block.1} parent=5 // pred_fallthru
      _
    %p2291 = scmp.le.s32.totalorder 2, %s25
    // Predicated region
    $region101: #{unet_attention_block.1} parent=5 // pred_check
      %p2292 = pneg %p2291
    $region102: #{unet_attention_block.1} parent=5 // pred_check_branch
      %2294 = sbr.rel (%p2292) target = $region104
    $region103: #{unet_attention_block.1} parent=5 // pred_region
      %s2295 = ssub.s32 %s25, 2
      // Predicated region
      $region105: #{unet_attention_block.1} parent=103 // pred_check
        %p2296 = pneg %p484
      $region106: #{unet_attention_block.1} parent=103 // pred_check_branch
        %2298 = sbr.rel (%p2296) target = $region108
      $region107: #{unet_attention_block.1} parent=103 // pred_region
        %s2299 = smul.u32 2, %s37
        %p2300 = scmp.lt.s32.totalorder %s36, 1
        %s2301 = scalar_select %p2300, %s36, 1
        %p2302 = scmp.lt.s32.totalorder %s2299, 1
        %s2303 = scalar_select %p2302, %s2299, 1
        %s2304 = smul.addr %s2301, 8
        %s2305 = sadd.s32 %s2303, %s2304
        %s2306 = smul.addr %s2305, 8
        %s2307 = scalar_lea.vmem %s19, %s2306
      $region108: #{unet_attention_block.1} parent=103 // pred_fallthru
        _
    $region104: #{unet_attention_block.1} parent=5 // pred_fallthru
      _
  $region6: #{unet_attention_block.1} parent=0 // loop_footer
    %s29 = sadd.s32 1, %s25
  $region7: #{unet_attention_block.1} parent=0 // loop_footer_branch
    %24 = sbr.rel target = $region3
  $region8: #{unet_attention_block.1} parent=0 // loop_exit
    _

</llo_original>
